<compile_context>
chip_gen: v7x
topology: tpu7x:2x2x1
jax: 0.10.0
libtpu: 0.0.40
codegen_flags: <defaults>
</compile_context>

<pallas_src>
import jax
import jax.numpy as jnp
from jax.experimental import pallas as pl
from jax.experimental.pallas import tpu as pltpu


def _decoder_kernel(z_ref, w1_ref, b1_ref, w2_ref, b2_ref, w3_ref, b3_ref,
                    x_ref, logits_ref, nll_ref):
    # ---- MLP decoder: Linear -> ReLU -> Linear -> ReLU -> Linear -----------
    # bf16 operands into the MXU, f32 accumulation.
    h1 = jnp.dot(z_ref[...], w1_ref[...], preferred_element_type=jnp.float32)
    h1 = jnp.maximum(h1 + b1_ref[...], 0.0)

    h2 = jnp.dot(h1.astype(jnp.bfloat16), w2_ref[...],
                 preferred_element_type=jnp.float32)
    h2 = jnp.maximum(h2 + b2_ref[...], 0.0)

    logits = jnp.dot(h2.astype(jnp.bfloat16), w3_ref[...],
                     preferred_element_type=jnp.float32)
    logits = logits + b3_ref[...]
    logits_ref[...] = logits

    # ---- neg log prob under Bernoulli(logits) (VPU + EUP) -------------------
    # -log p(x) = BCEWithLogits(l, x) = max(l, 0) - l*x + log(1 + exp(-|l|))
    x = x_ref[...].astype(jnp.float32)          # targets are exactly 0/1
    nll_ref[...] = (jnp.maximum(logits, 0.0) - logits * x
                    + jnp.log1p(jnp.exp(-jnp.abs(logits))))


def decoder_forward(z, x_nchw, params, *, tb=128):
    """Pallas-backed equivalent of BernoulliDecoder.forward(z, x)."""
    w1, b1, w2, b2, w3, b3 = params
    B, S = z.shape
    hidden = w1.shape[1]
    out_dim = w3.shape[1]
    x_flat = x_nchw.reshape(B, out_dim)          # torch: x.view(probs_x.shape)

    # Pad batch up to a multiple of the batch tile (pad rows sliced off below).
    n_blk = -(-B // tb)
    b_pad = n_blk * tb
    if b_pad != B:
        z = jnp.pad(z, ((0, b_pad - B), (0, 0)))
        x_flat = jnp.pad(x_flat, ((0, b_pad - B), (0, 0)))

    bf = jnp.bfloat16
    z_bf = z.astype(bf)
    x_bf = x_flat.astype(bf)                     # 0/1 -> lossless, halves HBM bytes
    w1b, w2b, w3b = w1.astype(bf), w2.astype(bf), w3.astype(bf)

    # Batch-tiled operands move with the grid; weights/biases stay resident.
    batch_in = lambda cols: pl.BlockSpec((tb, cols), lambda i: (i, 0))
    resident = lambda shape: pl.BlockSpec(shape, lambda i: (0, 0))

    flops = 2 * b_pad * (S * hidden + hidden * hidden + hidden * out_dim)
    bytes_accessed = (z_bf.size * 2 + x_bf.size * 2
                      + (w1b.size + w2b.size + w3b.size) * 2
                      + (b1.size + b2.size + b3.size) * 4
                      + 2 * b_pad * out_dim * 4)
    cost = pl.CostEstimate(flops=flops,
                           transcendentals=2 * b_pad * out_dim,
                           bytes_accessed=bytes_accessed)

    logits, nll = pl.pallas_call(
        _decoder_kernel,
        out_shape=(jax.ShapeDtypeStruct((b_pad, out_dim), jnp.float32),
                   jax.ShapeDtypeStruct((b_pad, out_dim), jnp.float32)),
        grid=(n_blk,),
        in_specs=[
            batch_in(S),                 # z
            resident((S, hidden)),       # w1
            resident((1, hidden)),       # b1
            resident((hidden, hidden)),  # w2
            resident((1, hidden)),       # b2
            resident((hidden, out_dim)), # w3
            resident((1, out_dim)),      # b3
            batch_in(out_dim),           # x
        ],
        out_specs=(batch_in(out_dim), batch_in(out_dim)),
        compiler_params=pltpu.CompilerParams(
            dimension_semantics=("parallel",)),
        cost_estimate=cost,
    )(z_bf, w1b, b1, w2b, b2, w3b, b3, x_bf)

    return logits[:B], nll[:B]


def init_params(key, s_dim, hidden, out_dim):
    """Deterministic init; weights stored (in, out) = transpose of torch Linear."""
    ks = jax.random.split(key, 6)

    def lin(kw, kb, fan_in, fan_out):
        bound = 1.0 / jnp.sqrt(fan_in)
        w = jax.random.uniform(kw, (fan_in, fan_out), jnp.float32, -bound, bound)
        b = jax.random.uniform(kb, (1, fan_out), jnp.float32, -bound, bound)
        return w, b

    w1, b1 = lin(ks[0], ks[1], s_dim, hidden)
    w2, b2 = lin(ks[2], ks[3], hidden, hidden)
    w3, b3 = lin(ks[4], ks[5], hidden, out_dim)
    return (w1, b1, w2, b2, w3, b3)


def _reference(z, x_nchw, params):
    """Same math as the kernel (bf16 MXU operands, f32 accumulation)."""
    w1, b1, w2, b2, w3, b3 = params
    bf = jnp.bfloat16
    h1 = jnp.dot(z.astype(bf), w1.astype(bf), preferred_element_type=jnp.float32)
    h1 = jnp.maximum(h1 + b1, 0.0)
    h2 = jnp.dot(h1.astype(bf), w2.astype(bf), preferred_element_type=jnp.float32)
    h2 = jnp.maximum(h2 + b2, 0.0)
    logits = jnp.dot(h2.astype(bf), w3.astype(bf), preferred_element_type=jnp.float32) + b3
    x = x_nchw.reshape(logits.shape).astype(jnp.float32)
    nll = jnp.maximum(logits, 0.0) - logits * x + jnp.log1p(jnp.exp(-jnp.abs(logits)))
    return logits, nll


if __name__ == "__main__":
    # Small shapes consistent with the tvae MLP decoder.
    # B=200 deliberately NOT a multiple of the 128-row batch tile: exercises
    # the pad + 2-step grid path (weights resident across steps).
    B, S, HIDDEN = 200, 32, 128
    C, HW = 1, 16
    OUT = C * HW * HW  # 256

    key = jax.random.PRNGKey(0)
    k_z, k_x, k_p = jax.random.split(key, 3)

    z = jax.random.normal(k_z, (B, S), dtype=jnp.float32)
    x = jax.random.bernoulli(k_x, 0.5, (B, C, HW, HW)).astype(jnp.float32)  # NCHW

    params = init_params(k_p, S, HIDDEN, OUT)

    logits, nll = decoder_forward(z, x, params, tb=128)
    jax.block_until_ready((logits, nll))

    ref_logits, ref_nll = _reference(z, x, params)
    assert logits.shape == (B, OUT) and nll.shape == (B, OUT)
    assert jnp.allclose(logits, ref_logits, atol=1e-3, rtol=1e-3)
    assert jnp.allclose(nll, ref_nll, atol=1e-3, rtol=1e-3)

    print("KERNEL_OK")
</pallas_src>

<mosaic_0001>
module attributes {stable_mosaic.version = 11 : i64} {
  func.func @_decoder_kernel(%arg0: i32, %arg1: memref<128x32xbf16, #tpu.memory_space<vmem>>, %arg2: memref<32x128xbf16, #tpu.memory_space<vmem>>, %arg3: memref<1x128xf32, #tpu.memory_space<vmem>>, %arg4: memref<128x128xbf16, #tpu.memory_space<vmem>>, %arg5: memref<1x128xf32, #tpu.memory_space<vmem>>, %arg6: memref<128x256xbf16, #tpu.memory_space<vmem>>, %arg7: memref<1x256xf32, #tpu.memory_space<vmem>>, %arg8: memref<128x256xbf16, #tpu.memory_space<vmem>>, %arg9: memref<128x256xf32, #tpu.memory_space<vmem>>, %arg10: memref<128x256xf32, #tpu.memory_space<vmem>>) attributes {dimension_semantics = [#tpu.dimension_semantics<parallel>], iteration_bounds = array<i64: 2>, scalar_prefetch = 0 : i64, scratch_operands = 0 : i64, tpu.core_type = #tpu.core_type<tc>, window_params = [{transform_indices = @transform_0, window_bounds = array<i64: 128, 32>}, {pipeline_mode = #tpu.pipeline_mode<synchronous>, transform_indices = @transform_1, window_bounds = array<i64: 32, 128>}, {pipeline_mode = #tpu.pipeline_mode<synchronous>, transform_indices = @transform_2, window_bounds = array<i64: 1, 128>}, {pipeline_mode = #tpu.pipeline_mode<synchronous>, transform_indices = @transform_3, window_bounds = array<i64: 128, 128>}, {pipeline_mode = #tpu.pipeline_mode<synchronous>, transform_indices = @transform_4, window_bounds = array<i64: 1, 128>}, {pipeline_mode = #tpu.pipeline_mode<synchronous>, transform_indices = @transform_5, window_bounds = array<i64: 128, 256>}, {pipeline_mode = #tpu.pipeline_mode<synchronous>, transform_indices = @transform_6, window_bounds = array<i64: 1, 256>}, {transform_indices = @transform_7, window_bounds = array<i64: 128, 256>}, {transform_indices = @transform_8, window_bounds = array<i64: 128, 256>}, {transform_indices = @transform_9, window_bounds = array<i64: 128, 256>}]} {
    %c0 = arith.constant 0 : index
    %c0_0 = arith.constant 0 : index
    %0 = vector.load %arg1[%c0, %c0_0] : memref<128x32xbf16, #tpu.memory_space<vmem>>, vector<128x32xbf16>
    %c0_1 = arith.constant 0 : index
    %c0_2 = arith.constant 0 : index
    %1 = vector.load %arg2[%c0_1, %c0_2] : memref<32x128xbf16, #tpu.memory_space<vmem>>, vector<32x128xbf16>
    %cst = arith.constant dense<0.000000e+00> : vector<128x128xf32>
    %2 = tpu.matmul %0, %1, %cst {dimension_numbers = #tpu.dot_dimension_numbers<[1], [0], [0], [1], [0, 0, 1, 1], [], []>} : vector<128x32xbf16>, vector<32x128xbf16>, vector<128x128xf32> -> vector<128x128xf32>
    %c0_3 = arith.constant 0 : index
    %c0_4 = arith.constant 0 : index
    %3 = vector.load %arg3[%c0_3, %c0_4] : memref<1x128xf32, #tpu.memory_space<vmem>>, vector<1x128xf32>
    %4 = vector.broadcast %3 : vector<1x128xf32> to vector<128x128xf32>
    %5 = arith.addf %2, %4 : vector<128x128xf32>
    %cst_5 = arith.constant 0.000000e+00 : f32
    %6 = vector.broadcast %cst_5 : f32 to vector<128x128xf32>
    %7 = arith.maximumf %5, %6 : vector<128x128xf32>
    %8 = arith.truncf %7 : vector<128x128xf32> to vector<128x128xbf16>
    %c0_6 = arith.constant 0 : index
    %c0_7 = arith.constant 0 : index
    %9 = vector.load %arg4[%c0_6, %c0_7] : memref<128x128xbf16, #tpu.memory_space<vmem>>, vector<128x128xbf16>
    %cst_8 = arith.constant dense<0.000000e+00> : vector<128x128xf32>
    %10 = tpu.matmul %8, %9, %cst_8 {dimension_numbers = #tpu.dot_dimension_numbers<[1], [0], [0], [1], [0, 0, 1, 1], [], []>} : vector<128x128xbf16>, vector<128x128xbf16>, vector<128x128xf32> -> vector<128x128xf32>
    %c0_9 = arith.constant 0 : index
    %c0_10 = arith.constant 0 : index
    %11 = vector.load %arg5[%c0_9, %c0_10] : memref<1x128xf32, #tpu.memory_space<vmem>>, vector<1x128xf32>
    %12 = vector.broadcast %11 : vector<1x128xf32> to vector<128x128xf32>
    %13 = arith.addf %10, %12 : vector<128x128xf32>
    %cst_11 = arith.constant 0.000000e+00 : f32
    %14 = vector.broadcast %cst_11 : f32 to vector<128x128xf32>
    %15 = arith.maximumf %13, %14 : vector<128x128xf32>
    %16 = arith.truncf %15 : vector<128x128xf32> to vector<128x128xbf16>
    %c0_12 = arith.constant 0 : index
    %c0_13 = arith.constant 0 : index
    %17 = vector.load %arg6[%c0_12, %c0_13] : memref<128x256xbf16, #tpu.memory_space<vmem>>, vector<128x256xbf16>
    %cst_14 = arith.constant dense<0.000000e+00> : vector<128x256xf32>
    %18 = tpu.matmul %16, %17, %cst_14 {dimension_numbers = #tpu.dot_dimension_numbers<[1], [0], [0], [1], [0, 0, 1, 1], [], []>} : vector<128x128xbf16>, vector<128x256xbf16>, vector<128x256xf32> -> vector<128x256xf32>
    %c0_15 = arith.constant 0 : index
    %c0_16 = arith.constant 0 : index
    %19 = vector.load %arg7[%c0_15, %c0_16] : memref<1x256xf32, #tpu.memory_space<vmem>>, vector<1x256xf32>
    %20 = vector.broadcast %19 : vector<1x256xf32> to vector<128x256xf32>
    %21 = arith.addf %18, %20 : vector<128x256xf32>
    %c0_17 = arith.constant 0 : index
    %c0_18 = arith.constant 0 : index
    %22 = vector.load %arg9[%c0_17, %c0_18] : memref<128x256xf32, #tpu.memory_space<vmem>>, vector<128x256xf32>
    tpu.vector_store %arg9[%c0_17, %c0_18], %21 {strides = array<i32>} : memref<128x256xf32, #tpu.memory_space<vmem>>, vector<128x256xf32>,
    %c0_19 = arith.constant 0 : index
    %c0_20 = arith.constant 0 : index
    %23 = vector.load %arg8[%c0_19, %c0_20] : memref<128x256xbf16, #tpu.memory_space<vmem>>, vector<128x256xbf16>
    %24 = arith.extf %23 : vector<128x256xbf16> to vector<128x256xf32>
    %cst_21 = arith.constant 0.000000e+00 : f32
    %25 = vector.broadcast %cst_21 : f32 to vector<128x256xf32>
    %26 = arith.maximumf %21, %25 : vector<128x256xf32>
    %27 = arith.mulf %21, %24 : vector<128x256xf32>
    %28 = arith.subf %26, %27 : vector<128x256xf32>
    %29 = math.absf %21 : vector<128x256xf32>
    %cst_22 = arith.constant 0.000000e+00 : f32
    %30 = vector.broadcast %cst_22 : f32 to vector<128x256xf32>
    %31 = arith.subf %30, %29 : vector<128x256xf32>
    %32 = math.exp %31 : vector<128x256xf32>
    %33 = math.log1p %32 : vector<128x256xf32>
    %34 = arith.addf %28, %33 : vector<128x256xf32>
    %c0_23 = arith.constant 0 : index
    %c0_24 = arith.constant 0 : index
    %35 = vector.load %arg10[%c0_23, %c0_24] : memref<128x256xf32, #tpu.memory_space<vmem>>, vector<128x256xf32>
    tpu.vector_store %arg10[%c0_23, %c0_24], %34 {strides = array<i32>} : memref<128x256xf32, #tpu.memory_space<vmem>>, vector<128x256xf32>,
    return
  }
  func.func @transform_0(%arg0: i32) -> (i32, i32) {
    %c0_i32 = arith.constant 0 : i32
    %c0_i32_0 = arith.constant 0 : i32
    return %arg0, %c0_i32 : i32, i32
  }
  func.func @transform_1(%arg0: i32) -> (i32, i32) {
    %c0_i32 = arith.constant 0 : i32
    %c0_i32_0 = arith.constant 0 : i32
    %c0_i32_1 = arith.constant 0 : i32
    return %c0_i32, %c0_i32_0 : i32, i32
  }
  func.func @transform_2(%arg0: i32) -> (i32, i32) {
    %c0_i32 = arith.constant 0 : i32
    %c0_i32_0 = arith.constant 0 : i32
    %c0_i32_1 = arith.constant 0 : i32
    return %c0_i32, %c0_i32_0 : i32, i32
  }
  func.func @transform_3(%arg0: i32) -> (i32, i32) {
    %c0_i32 = arith.constant 0 : i32
    %c0_i32_0 = arith.constant 0 : i32
    %c0_i32_1 = arith.constant 0 : i32
    return %c0_i32, %c0_i32_0 : i32, i32
  }
  func.func @transform_4(%arg0: i32) -> (i32, i32) {
    %c0_i32 = arith.constant 0 : i32
    %c0_i32_0 = arith.constant 0 : i32
    %c0_i32_1 = arith.constant 0 : i32
    return %c0_i32, %c0_i32_0 : i32, i32
  }
  func.func @transform_5(%arg0: i32) -> (i32, i32) {
    %c0_i32 = arith.constant 0 : i32
    %c0_i32_0 = arith.constant 0 : i32
    %c0_i32_1 = arith.constant 0 : i32
    return %c0_i32, %c0_i32_0 : i32, i32
  }
  func.func @transform_6(%arg0: i32) -> (i32, i32) {
    %c0_i32 = arith.constant 0 : i32
    %c0_i32_0 = arith.constant 0 : i32
    %c0_i32_1 = arith.constant 0 : i32
    return %c0_i32, %c0_i32_0 : i32, i32
  }
  func.func @transform_7(%arg0: i32) -> (i32, i32) {
    %c0_i32 = arith.constant 0 : i32
    %c0_i32_0 = arith.constant 0 : i32
    return %arg0, %c0_i32 : i32, i32
  }
  func.func @transform_8(%arg0: i32) -> (i32, i32) {
    %c0_i32 = arith.constant 0 : i32
    %c0_i32_0 = arith.constant 0 : i32
    return %arg0, %c0_i32 : i32, i32
  }
  func.func @transform_9(%arg0: i32) -> (i32, i32) {
    %c0_i32 = arith.constant 0 : i32
    %c0_i32_0 = arith.constant 0 : i32
    return %arg0, %c0_i32 : i32, i32
  }
}

</mosaic_0001>

<llo_original>
// kernel: tpu_custom_call.1
$region0: #{tpu_custom_call.1}
  #allocation0 [shape = 'u32[]', space=smem, size = 0x4, offset = 0x4, fixed_abs, tag = 'smem constant byte address 0x4 - core index']
  #allocation1 [shape = 'u32[144,128]{1,0:T(1,128)}', space=vmem, size = 0x12000, scoped, tag = 'internal scratch']
  %s0 = inlined_call_operand.vmem [shape: bf16[256,32], index: 0, kind: input, shape index: {}]
  %s1 = inlined_call_operand.vmem [shape: bf16[32,128], index: 1, kind: input, shape index: {}]
  %s2 = inlined_call_operand.vmem [shape: f32[1,128], index: 2, kind: input, shape index: {}]
  %s3 = inlined_call_operand.hbm [shape: bf16[128,128], index: 3, kind: input, shape index: {}]
  %s4 = inlined_call_operand.vmem [shape: f32[1,128], index: 4, kind: input, shape index: {}]
  %s5 = inlined_call_operand.vmem [shape: bf16[128,256], index: 5, kind: input, shape index: {}]
  %s6 = inlined_call_operand.vmem [shape: f32[1,256], index: 6, kind: input, shape index: {}]
  %s7 = inlined_call_operand.hbm [shape: bf16[256,256], index: 7, kind: input, shape index: {}]
  %s8 = inlined_call_operand.hbm [shape: f32[256,256], index: 8, kind: output, shape index: {0}]
  %s9 = inlined_call_operand.hbm [shape: f32[256,256], index: 9, kind: output, shape index: {1}]
  %10 = xla_tuple %s8, %s9
  %s11 = sld [smem:[#allocation0]]
  $region81: #{tpu_custom_call.1} parent=0
    _
  %s13 = ssub.s32 1, %s11
  %s14 = scalar_select 0, %s13, %s11
  $region1: #{tpu_custom_call.1} parent=0
    #allocation2 [shape = 'u8[32768]{0}', space=vmem, size = 0x8000, scoped, tag = 'input window, operand 3, single buffered']
    #allocation3 [shape = 's32[2]{0}', space=sflag, size = 0x8, scoped, tag = 'scoped memory for tpu_custom_call.1']
    #allocation4 [shape = 's32[2]{0}', space=sflag, size = 0x8, scoped, tag = 'scoped memory for tpu_custom_call.1']
    #allocation5 [shape = 'u8[131072]{0}', space=vmem, size = 0x20000, scoped, tag = 'input window, operand 7']
    #allocation6 [shape = 's32[2]{0}', space=sflag, size = 0x8, scoped, tag = 'scoped memory for tpu_custom_call.1']
    #allocation7 [shape = 'u8[262144]{0}', space=vmem, size = 0x40000, scoped, tag = 'output window, operand 0']
    #allocation8 [shape = 'u8[262144]{0}', space=vmem, size = 0x40000, scoped, tag = 'output window, operand 1']
    #allocation9 [shape = 's32[2]{0}', space=sflag, size = 0x8, scoped, tag = 'scoped memory for tpu_custom_call.1']
    %15 = vsyncpa [#allocation3], 0
    %16 = vsyncpa [#allocation6], 0
    %s17 = scalar_lea.sflag [#allocation6], 1
    %18 = vsyncpa %s17, 0
    %19 = vsyncpa [#allocation4], 0
    %s20 = scalar_lea.sflag [#allocation4], 1
    %21 = vsyncpa %s20, 0
    %22 = vsyncpa [#allocation9], 0
    %s23 = scalar_lea.sflag [#allocation9], 1
    %24 = vsyncpa %s23, 0
    loop: start=0, step=1, limit=4
    $region2: #{tpu_custom_call.1} parent=1 // loop_pre_header
      _
    $region3: #{tpu_custom_call.1} parent=1 // loop_header
      %s26 = sphi 0, %s30
      %p27 = scmp.ge.s32.totalorder %s26, 4
      %s36 = sphi 0, %s38
      %s39 = sphi 0, %s36
      %s40 = sphi 0, %s39
      %s56 = sphi 0, %s40
      %s60 = sphi 0, %s60
      %s62 = sphi 0, %s60
      %s63 = sphi 0, %s62
      %s77 = sphi 0, %s63
      %s81 = sphi 0, %s81
      %s83 = sphi 0, %s81
      %s84 = sphi 0, %s83
      %s98 = sphi 0, %s84
      %s102 = sphi 0, %s102
      %s104 = sphi 0, %s102
      %s105 = sphi 0, %s104
      %s119 = sphi 0, %s105
      %s123 = sphi 0, %s123
      %s125 = sphi 0, %s123
      %s126 = sphi 0, %s125
      %s140 = sphi 0, %s126
      %s144 = sphi 0, %s144
      %s146 = sphi 0, %s144
      %s147 = sphi 0, %s146
      %s161 = sphi 0, %s147
      %s165 = sphi 0, %s165
      %s167 = sphi 0, %s165
      %s168 = sphi 0, %s167
      %s182 = sphi 0, %s168
      %s188 = sphi 0, %s190
      %s191 = sphi 0, %s188
      %s192 = sphi 0, %s191
      %s208 = sphi 0, %s192
      %s214 = sphi 0, %s216
      %s217 = sphi 0, %s214
      %s218 = sphi 0, %s217
      %s234 = sphi 0, %s218
      %s240 = sphi 0, %s242
      %s243 = sphi 0, %s240
      %s244 = sphi 0, %s243
      %s260 = sphi 0, %s244
    $region4: #{tpu_custom_call.1} parent=1 // loop_header_branch
      %29 = sbr.rel (%p27) target = $region8
    $region5: #{tpu_custom_call.1} parent=1 // loop_body
      %s31 = ssub.s32 %s26, 1
      %s32 = ssub.s32 %s26, 2
      %s33 = sadd.s32 %s26, 1
      %s34 = ssub.s32 %s26, %s33
      %p35 = scmp.eq.s32.totalorder %s34, 0
      %s37 = sadd.s32 %s36, 1
      %s38 = scalar_select %p35, %s36, %s37
      %p41 = pneg %p35
      %p42 = scmp.eq.s32.totalorder %s26, 1
      %p43 = por %p41, %p42
      %p44 = scmp.ne.s32.totalorder %s36, %s39
      %p45 = scmp.eq.s32.totalorder %s26, 0
      %p46 = por %p44, %p45
      %p47 = scmp.ne.s32.totalorder %s36, %s39
      %p48 = scmp.eq.s32.totalorder %s31, 1
      %p49 = por %p47, %p48
      %p50 = scmp.ne.s32.totalorder %s39, %s40
      %p51 = scmp.eq.s32.totalorder %s31, 0
      %p52 = por %p50, %p51
      %p53 = scmp.ne.s32.totalorder %s39, %s40
      %p54 = scmp.eq.s32.totalorder %s32, 1
      %p55 = por %p53, %p54
      %p57 = scmp.ne.s32.totalorder %s40, %s56
      %p58 = scmp.eq.s32.totalorder %s32, 0
      %p59 = por %p57, %p58
      %s61 = sadd.s32 %s60, 1
      %p64 = scmp.eq.s32.totalorder %s26, 1
      %p65 = scmp.ne.s32.totalorder %s60, %s62
      %p66 = scmp.eq.s32.totalorder %s26, 0
      %p67 = por %p65, %p66
      %p68 = scmp.ne.s32.totalorder %s60, %s62
      %p69 = scmp.eq.s32.totalorder %s31, 1
      %p70 = por %p68, %p69
      %p71 = scmp.ne.s32.totalorder %s62, %s63
      %p72 = scmp.eq.s32.totalorder %s31, 0
      %p73 = por %p71, %p72
      %p74 = scmp.ne.s32.totalorder %s62, %s63
      %p75 = scmp.eq.s32.totalorder %s32, 1
      %p76 = por %p74, %p75
      %p78 = scmp.ne.s32.totalorder %s63, %s77
      %p79 = scmp.eq.s32.totalorder %s32, 0
      %p80 = por %p78, %p79
      %s82 = sadd.s32 %s81, 1
      %p85 = scmp.eq.s32.totalorder %s26, 1
      %p86 = scmp.ne.s32.totalorder %s81, %s83
      %p87 = scmp.eq.s32.totalorder %s26, 0
      %p88 = por %p86, %p87
      %p89 = scmp.ne.s32.totalorder %s81, %s83
      %p90 = scmp.eq.s32.totalorder %s31, 1
      %p91 = por %p89, %p90
      %p92 = scmp.ne.s32.totalorder %s83, %s84
      %p93 = scmp.eq.s32.totalorder %s31, 0
      %p94 = por %p92, %p93
      %p95 = scmp.ne.s32.totalorder %s83, %s84
      %p96 = scmp.eq.s32.totalorder %s32, 1
      %p97 = por %p95, %p96
      %p99 = scmp.ne.s32.totalorder %s84, %s98
      %p100 = scmp.eq.s32.totalorder %s32, 0
      %p101 = por %p99, %p100
      %s103 = sadd.s32 %s102, 1
      %p106 = scmp.eq.s32.totalorder %s26, 1
      %p107 = scmp.ne.s32.totalorder %s102, %s104
      %p108 = scmp.eq.s32.totalorder %s26, 0
      %p109 = por %p107, %p108
      %p110 = scmp.ne.s32.totalorder %s102, %s104
      %p111 = scmp.eq.s32.totalorder %s31, 1
      %p112 = por %p110, %p111
      %p113 = scmp.ne.s32.totalorder %s104, %s105
      %p114 = scmp.eq.s32.totalorder %s31, 0
      %p115 = por %p113, %p114
      %p116 = scmp.ne.s32.totalorder %s104, %s105
      %p117 = scmp.eq.s32.totalorder %s32, 1
      %p118 = por %p116, %p117
      %p120 = scmp.ne.s32.totalorder %s105, %s119
      %p121 = scmp.eq.s32.totalorder %s32, 0
      %p122 = por %p120, %p121
      %s124 = sadd.s32 %s123, 1
      %p127 = scmp.eq.s32.totalorder %s26, 1
      %p128 = scmp.ne.s32.totalorder %s123, %s125
      %p129 = scmp.eq.s32.totalorder %s26, 0
      %p130 = por %p128, %p129
      %p131 = scmp.ne.s32.totalorder %s123, %s125
      %p132 = scmp.eq.s32.totalorder %s31, 1
      %p133 = por %p131, %p132
      %p134 = scmp.ne.s32.totalorder %s125, %s126
      %p135 = scmp.eq.s32.totalorder %s31, 0
      %p136 = por %p134, %p135
      %p137 = scmp.ne.s32.totalorder %s125, %s126
      %p138 = scmp.eq.s32.totalorder %s32, 1
      %p139 = por %p137, %p138
      %p141 = scmp.ne.s32.totalorder %s126, %s140
      %p142 = scmp.eq.s32.totalorder %s32, 0
      %p143 = por %p141, %p142
      %s145 = sadd.s32 %s144, 1
      %p148 = scmp.eq.s32.totalorder %s26, 1
      %p149 = scmp.ne.s32.totalorder %s144, %s146
      %p150 = scmp.eq.s32.totalorder %s26, 0
      %p151 = por %p149, %p150
      %p152 = scmp.ne.s32.totalorder %s144, %s146
      %p153 = scmp.eq.s32.totalorder %s31, 1
      %p154 = por %p152, %p153
      %p155 = scmp.ne.s32.totalorder %s146, %s147
      %p156 = scmp.eq.s32.totalorder %s31, 0
      %p157 = por %p155, %p156
      %p158 = scmp.ne.s32.totalorder %s146, %s147
      %p159 = scmp.eq.s32.totalorder %s32, 1
      %p160 = por %p158, %p159
      %p162 = scmp.ne.s32.totalorder %s147, %s161
      %p163 = scmp.eq.s32.totalorder %s32, 0
      %p164 = por %p162, %p163
      %s166 = sadd.s32 %s165, 1
      %p169 = scmp.eq.s32.totalorder %s26, 1
      %p170 = scmp.ne.s32.totalorder %s165, %s167
      %p171 = scmp.eq.s32.totalorder %s26, 0
      %p172 = por %p170, %p171
      %p173 = scmp.ne.s32.totalorder %s165, %s167
      %p174 = scmp.eq.s32.totalorder %s31, 1
      %p175 = por %p173, %p174
      %p176 = scmp.ne.s32.totalorder %s167, %s168
      %p177 = scmp.eq.s32.totalorder %s31, 0
      %p178 = por %p176, %p177
      %p179 = scmp.ne.s32.totalorder %s167, %s168
      %p180 = scmp.eq.s32.totalorder %s32, 1
      %p181 = por %p179, %p180
      %p183 = scmp.ne.s32.totalorder %s168, %s182
      %p184 = scmp.eq.s32.totalorder %s32, 0
      %p185 = por %p183, %p184
      %s186 = ssub.s32 %s26, %s33
      %p187 = scmp.eq.s32.totalorder %s186, 0
      %s189 = sadd.s32 %s188, 1
      %s190 = scalar_select %p187, %s188, %s189
      %p193 = pneg %p187
      %p194 = scmp.eq.s32.totalorder %s26, 1
      %p195 = por %p193, %p194
      %p196 = scmp.ne.s32.totalorder %s188, %s191
      %p197 = scmp.eq.s32.totalorder %s26, 0
      %p198 = por %p196, %p197
      %p199 = scmp.ne.s32.totalorder %s188, %s191
      %p200 = scmp.eq.s32.totalorder %s31, 1
      %p201 = por %p199, %p200
      %p202 = scmp.ne.s32.totalorder %s191, %s192
      %p203 = scmp.eq.s32.totalorder %s31, 0
      %p204 = por %p202, %p203
      %p205 = scmp.ne.s32.totalorder %s191, %s192
      %p206 = scmp.eq.s32.totalorder %s32, 1
      %p207 = por %p205, %p206
      %p209 = scmp.ne.s32.totalorder %s192, %s208
      %p210 = scmp.eq.s32.totalorder %s32, 0
      %p211 = por %p209, %p210
      %s212 = ssub.s32 %s26, %s33
      %p213 = scmp.eq.s32.totalorder %s212, 0
      %s215 = sadd.s32 %s214, 1
      %s216 = scalar_select %p213, %s214, %s215
      %p219 = pneg %p213
      %p220 = scmp.eq.s32.totalorder %s26, 1
      %p221 = por %p219, %p220
      %p222 = scmp.ne.s32.totalorder %s214, %s217
      %p223 = scmp.eq.s32.totalorder %s26, 0
      %p224 = por %p222, %p223
      %p225 = scmp.ne.s32.totalorder %s214, %s217
      %p226 = scmp.eq.s32.totalorder %s31, 1
      %p227 = por %p225, %p226
      %p228 = scmp.ne.s32.totalorder %s217, %s218
      %p229 = scmp.eq.s32.totalorder %s31, 0
      %p230 = por %p228, %p229
      %p231 = scmp.ne.s32.totalorder %s217, %s218
      %p232 = scmp.eq.s32.totalorder %s32, 1
      %p233 = por %p231, %p232
      %p235 = scmp.ne.s32.totalorder %s218, %s234
      %p236 = scmp.eq.s32.totalorder %s32, 0
      %p237 = por %p235, %p236
      %s238 = ssub.s32 %s26, %s33
      %p239 = scmp.eq.s32.totalorder %s238, 0
      %s241 = sadd.s32 %s240, 1
      %s242 = scalar_select %p239, %s240, %s241
      %p245 = pneg %p239
      %p246 = scmp.eq.s32.totalorder %s26, 1
      %p247 = por %p245, %p246
      %p248 = scmp.ne.s32.totalorder %s240, %s243
      %p249 = scmp.eq.s32.totalorder %s26, 0
      %p250 = por %p248, %p249
      %p251 = scmp.ne.s32.totalorder %s240, %s243
      %p252 = scmp.eq.s32.totalorder %s31, 1
      %p253 = por %p251, %p252
      %p254 = scmp.ne.s32.totalorder %s243, %s244
      %p255 = scmp.eq.s32.totalorder %s31, 0
      %p256 = por %p254, %p255
      %p257 = scmp.ne.s32.totalorder %s243, %s244
      %p258 = scmp.eq.s32.totalorder %s32, 1
      %p259 = por %p257, %p258
      %p261 = scmp.ne.s32.totalorder %s244, %s260
      %p262 = scmp.eq.s32.totalorder %s32, 0
      %p263 = por %p261, %p262
      %p264 = scmp.le.s32.totalorder 1, %s26
      %p265 = scmp.lt.s32.totalorder %s26, 3
      %p266 = pnand %p264, %p265
      %p267 = pneg %p266
      // Predicated region
      $region9: #{tpu_custom_call.1} parent=5 // pred_check
        _
      $region10: #{tpu_custom_call.1} parent=5 // pred_check_branch
        %269 = sbr.rel (%p266) target = $region12
      $region11: #{tpu_custom_call.1} parent=5 // pred_region
        %s270 = ssub.s32 %s26, 1
        // Predicated region
        $region13: #{tpu_custom_call.1} parent=11 // pred_check
          %p271 = pneg %p73
        $region14: #{tpu_custom_call.1} parent=11 // pred_check_branch
          %273 = sbr.rel (%p271) target = $region16
        $region15: #{tpu_custom_call.1} parent=11 // pred_region
          _
        $region16: #{tpu_custom_call.1} parent=11 // pred_fallthru
          _
        // Predicated region
        $region17: #{tpu_custom_call.1} parent=11 // pred_check
          %p274 = pneg %p94
        $region18: #{tpu_custom_call.1} parent=11 // pred_check_branch
          %276 = sbr.rel (%p274) target = $region20
        $region19: #{tpu_custom_call.1} parent=11 // pred_region
          _
        $region20: #{tpu_custom_call.1} parent=11 // pred_fallthru
          _
        // Predicated region
        $region21: #{tpu_custom_call.1} parent=11 // pred_check
          %p277 = pneg %p115
        $region22: #{tpu_custom_call.1} parent=11 // pred_check_branch
          %279 = sbr.rel (%p277) target = $region24
        $region23: #{tpu_custom_call.1} parent=11 // pred_region
          %s281 = ssub.s32 1024, 1024
          %282 = vsyncadd [#allocation3], %s281
          %s283 = sshll.u32 [#allocation2], 4
          %s284 = int_to_ptr.vmem [resolvable:$true] %s283
          %289 = dma.hbm_to_vmem [thread:$0]  %s3, 1024, %s284, [#allocation3], 64, 64, 4
        $region24: #{tpu_custom_call.1} parent=11 // pred_fallthru
          _
        // Predicated region
        $region25: #{tpu_custom_call.1} parent=11 // pred_check
          %p290 = pneg %p136
        $region26: #{tpu_custom_call.1} parent=11 // pred_check_branch
          %292 = sbr.rel (%p290) target = $region28
        $region27: #{tpu_custom_call.1} parent=11 // pred_region
          _
        $region28: #{tpu_custom_call.1} parent=11 // pred_fallthru
          _
        // Predicated region
        $region29: #{tpu_custom_call.1} parent=11 // pred_check
          %p293 = pneg %p157
        $region30: #{tpu_custom_call.1} parent=11 // pred_check_branch
          %295 = sbr.rel (%p293) target = $region32
        $region31: #{tpu_custom_call.1} parent=11 // pred_region
          _
        $region32: #{tpu_custom_call.1} parent=11 // pred_fallthru
          _
        // Predicated region
        $region33: #{tpu_custom_call.1} parent=11 // pred_check
          %p296 = pneg %p178
        $region34: #{tpu_custom_call.1} parent=11 // pred_check_branch
          %298 = sbr.rel (%p296) target = $region36
        $region35: #{tpu_custom_call.1} parent=11 // pred_region
          _
        $region36: #{tpu_custom_call.1} parent=11 // pred_fallthru
          _
      $region12: #{tpu_custom_call.1} parent=5 // pred_fallthru
        _
      %p299 = scmp.lt.s32.totalorder %s26, 2
      // Predicated region
      $region37: #{tpu_custom_call.1} parent=5 // pred_check
        %p300 = pneg %p299
      $region38: #{tpu_custom_call.1} parent=5 // pred_check_branch
        %302 = sbr.rel (%p300) target = $region40
      $region39: #{tpu_custom_call.1} parent=5 // pred_region
        // Predicated region
        $region41: #{tpu_custom_call.1} parent=39 // pred_check
          %p303 = pneg %p46
        $region42: #{tpu_custom_call.1} parent=39 // pred_check_branch
          %305 = sbr.rel (%p303) target = $region44
        $region43: #{tpu_custom_call.1} parent=39 // pred_region
          %s306 = smul.u32 16, %s26
          %p307 = scmp.lt.s32.totalorder %s306, 31
          %s308 = scalar_select %p307, %s306, 31
          %s309 = smul.addr %s308, 4
          %s310 = scalar_lea.vmem %s0, %s309
          %s311 = smul.u32 16, %s26
        $region44: #{tpu_custom_call.1} parent=39 // pred_fallthru
          _
        // Predicated region
        $region45: #{tpu_custom_call.1} parent=39 // pred_check
          %p312 = pneg %p198
        $region46: #{tpu_custom_call.1} parent=39 // pred_check_branch
          %314 = sbr.rel (%p312) target = $region48
        $region47: #{tpu_custom_call.1} parent=39 // pred_region
          %s315 = sand.u32 %s188, 1
          %s316 = scalar_lea.sflag [#allocation6], %s315
          %s317 = sand.u32 %s188, 1
          %s318 = smul.addr %s317, 128
          %s319 = scalar_lea.vmem [#allocation5], %s318
          %s320 = smul.u32 16, %s26
          %s322 = ssub.s32 2048, 2048
          %323 = vsyncadd %s316, %s322
          %s324 = smul.addr %s320, 2
          %s325 = smul.addr %s324, 64
          %s326 = scalar_lea.hbm %s7, %s325
          %s327 = sshll.u32 %s319, 4
          %s328 = int_to_ptr.vmem [resolvable:$true] %s327
          %333 = dma.hbm_to_vmem [thread:$0]  %s326, 2048, %s328, %s316, 128, 128, 8
        $region48: #{tpu_custom_call.1} parent=39 // pred_fallthru
          _
      $region40: #{tpu_custom_call.1} parent=5 // pred_fallthru
        _
      %p334 = scmp.le.s32.totalorder 1, %s26
      %p335 = scmp.lt.s32.totalorder %s26, 3
      %p336 = pnand %p334, %p335
      %p337 = pneg %p336
      // Predicated region
      $region49: #{tpu_custom_call.1} parent=5 // pred_check
        _
      $region50: #{tpu_custom_call.1} parent=5 // pred_check_branch
        %339 = sbr.rel (%p336) target = $region52
      $region51: #{tpu_custom_call.1} parent=5 // pred_region
        %s340 = ssub.s32 %s26, 1
        // Predicated region
        $region53: #{tpu_custom_call.1} parent=51 // pred_check
          %p341 = pneg %p115
        $region54: #{tpu_custom_call.1} parent=51 // pred_check_branch
          %343 = sbr.rel (%p341) target = $region56
        $region55: #{tpu_custom_call.1} parent=51 // pred_region
          %344 = dma.done [#allocation3], 1024
        $region56: #{tpu_custom_call.1} parent=51 // pred_fallthru
          _
        %s345 = sand.u32 %s191, 1
        %s346 = scalar_lea.sflag [#allocation6], %s345
        %s347 = sand.u32 %s191, 1
        %s348 = smul.addr %s347, 128
        %s349 = scalar_lea.vmem [#allocation5], %s348
        // Predicated region
        $region57: #{tpu_custom_call.1} parent=51 // pred_check
          %p350 = pneg %p204
        $region58: #{tpu_custom_call.1} parent=51 // pred_check_branch
          %352 = sbr.rel (%p350) target = $region60
        $region59: #{tpu_custom_call.1} parent=51 // pred_region
          %353 = dma.done %s346, 2048
        $region60: #{tpu_custom_call.1} parent=51 // pred_fallthru
          _
        %s354 = smul.u32 16, %s31
        %p355 = scmp.lt.s32.totalorder %s354, 31
        %s356 = scalar_select %p355, %s354, 31
        %s357 = smul.addr %s356, 4
        %s358 = scalar_lea.vmem %s0, %s357
        %p359 = pneg %p52
        %p360 = pneg %p49
        %p361 = pneg %p73
        %p362 = pneg %p70
        %p363 = pneg %p94
        %p364 = pneg %p91
        %p365 = pneg %p115
        %p366 = pneg %p112
        %p367 = pneg %p136
        %p368 = pneg %p133
        %p369 = pneg %p157
        %p370 = pneg %p154
        %p371 = pneg %p178
        %p372 = pneg %p175
        %s373 = sand.u32 %s191, 1
        %s374 = scalar_lea.sflag [#allocation6], %s373
        %s375 = sand.u32 %s191, 1
        %s376 = smul.addr %s375, 128
        %s377 = scalar_lea.vmem [#allocation5], %s376
        %p378 = pneg %p204
        %p379 = pneg %p201
        %p380 = pneg %p230
        %p381 = pneg %p227
        %s382 = sand.u32 %s217, 1
        %s383 = scalar_lea.sflag [#allocation4], %s382
        %s384 = sand.u32 %s217, 1
        %s385 = smul.addr %s384, 256
        %s386 = scalar_lea.vmem [#allocation7], %s385
        %p387 = pneg %p256
        %p388 = pneg %p253
        %s389 = sand.u32 %s243, 1
        %s390 = scalar_lea.sflag [#allocation9], %s389
        %s391 = sand.u32 %s243, 1
        %s392 = smul.addr %s391, 256
        %s393 = scalar_lea.vmem [#allocation8], %s392
        %s394 = smul.u32 16, %s31
        %p395 = scmp.lt.s32.totalorder %s394, 31
        %s396 = scalar_select %p395, %s394, 31
        %s397 = smul.addr %s396, 4
        %s398 = scalar_lea.vmem %s0, %s397
        %s399 = smul.u32 16, %s31
        %s400 = smul.u32 16, %s31
        %s401 = smul.u32 16, %s31
        %s402 = smul.u32 16, %s31
        %v404 = vld [vmem:[%s398] sm:$0xf]
        %v405 = vld [vmem:[%s398 + $0x4] sm:$0xf]
        %v406 = vld [vmem:[%s398 + $0x8] sm:$0xf]
        %v407 = vld [vmem:[%s398 + $0xc] sm:$0xf]
        %v408 = vld [vmem:[%s398 + $0x10] sm:$0xf]
        %v409 = vld [vmem:[%s398 + $0x14] sm:$0xf]
        %v410 = vld [vmem:[%s398 + $0x18] sm:$0xf]
        %v411 = vld [vmem:[%s398 + $0x1c] sm:$0xf]
        %v412 = vld [vmem:[%s398 + $0x20] sm:$0xf]
        %v413 = vld [vmem:[%s398 + $0x24] sm:$0xf]
        %v414 = vld [vmem:[%s398 + $0x28] sm:$0xf]
        %v415 = vld [vmem:[%s398 + $0x2c] sm:$0xf]
        %v416 = vld [vmem:[%s398 + $0x30] sm:$0xf]
        %v417 = vld [vmem:[%s398 + $0x34] sm:$0xf]
        %v418 = vld [vmem:[%s398 + $0x38] sm:$0xf]
        %v419 = vld [vmem:[%s398 + $0x3c] sm:$0xf]
        %v420 = vld [vmem:[%s1] sm:$0xf]
        %v421 = vld [vmem:[%s1 + $0x4] sm:$0xf]
        %v422 = vld [vmem:[%s1 + $0x8] sm:$0xf]
        %v423 = vld [vmem:[%s1 + $0xc] sm:$0xf]
        %v424 = vld [vmem:[%s2] sm:$0x1]
        %v426 = vlaneseq
        %v427 = vshrl.u32 %v426, 7
        %v428 = vsub.s32 0, %v427
        %v429 = vrot.slane %v424, %v428
        %v447 = vunpack.c.l.b16 %v404
        %v448 = vunpack.c.l.b16 %v405
        %v449 = vunpack.c.l.b16 %v406
        %v450 = vunpack.c.l.b16 %v407
        %v451 = vunpack.c.l.b16 %v408
        %v452 = vunpack.c.l.b16 %v409
        %v453 = vunpack.c.l.b16 %v410
        %v454 = vunpack.c.l.b16 %v411
        %v455 = vunpack.c.l.b16 %v412
        %v456 = vunpack.c.l.b16 %v413
        %v457 = vunpack.c.l.b16 %v414
        %v458 = vunpack.c.l.b16 %v415
        %v459 = vunpack.c.l.b16 %v416
        %v460 = vunpack.c.l.b16 %v417
        %v461 = vunpack.c.l.b16 %v418
        %v462 = vunpack.c.l.b16 %v419
        %v463 = vpack.c.b16 %v448, %v447
        %v464 = vpack.c.b16 %v450, %v449
        %v465 = vpack.c.b16 %v452, %v451
        %v466 = vpack.c.b16 %v454, %v453
        %v467 = vpack.c.b16 %v456, %v455
        %v468 = vpack.c.b16 %v458, %v457
        %v469 = vpack.c.b16 %v460, %v459
        %v470 = vpack.c.b16 %v462, %v461
        %v475 = vunpack.c.l.b16 %v420
        %v476 = vunpack.c.l.b16 %v421
        %v477 = vunpack.c.l.b16 %v422
        %v478 = vunpack.c.l.b16 %v423
        %v479 = vpack.c.b16 %v476, %v475
        %v480 = vpack.c.b16 %v478, %v477
        %vm483 = vcmask 261120
        %v485 = vsel %vm483, %v463, 0
        %v488 = vsel %vm483, %v464, 0
        %v491 = vsel %vm483, %v465, 0
        %v494 = vsel %vm483, %v466, 0
        %v497 = vsel %vm483, %v467, 0
        %v500 = vsel %vm483, %v468, 0
        %v503 = vsel %vm483, %v469, 0
        %v506 = vsel %vm483, %v470, 0
        %508 = vmatprep.subr.bf16.mxu0 0
        %509 = vmatpush1.bf16.msra.mxu0 %v479
        %510 = vmatprep.subr.bf16.mxu0 0
        %511 = vmatpush1.bf16.msra.mxu0 %v480
        %512 = vmatprep.subr.bf16.mxu0 0
        %513 = vmatpush1.bf16.msra.mxu0 0
        %514 = vmatprep.subr.bf16.mxu0 0
        %515 = vmatpush1.bf16.msra.mxu0 0
        %516 = vmatprep.subr.bf16.mxu0 0
        %517 = vmatpush1.bf16.msra.mxu0 0
        %518 = vmatprep.subr.bf16.mxu0 0
        %519 = vmatpush1.bf16.msra.mxu0 0
        %520 = vmatprep.subr.bf16.mxu0 0
        %521 = vmatpush1.bf16.msra.mxu0 0
        %522 = vmatprep.subr.bf16.mxu0 0
        %523 = vmatpush1.bf16.msra.mxu0 0
        %524 = vmatprep.subr.bf16.mxu0 0
        %525 = vmatpush1.bf16.msra.mxu0 0
        %526 = vmatprep.subr.bf16.mxu0 0
        %527 = vmatpush1.bf16.msra.mxu0 0
        %528 = vmatprep.subr.bf16.mxu0 0
        %529 = vmatpush1.bf16.msra.mxu0 0
        %530 = vmatprep.subr.bf16.mxu0 0
        %531 = vmatpush1.bf16.msra.mxu0 0
        %532 = vmatprep.subr.bf16.mxu0 0
        %533 = vmatpush1.bf16.msra.mxu0 0
        %534 = vmatprep.subr.bf16.mxu0 0
        %535 = vmatpush1.bf16.msra.mxu0 0
        %536 = vmatprep.subr.bf16.mxu0 0
        %537 = vmatpush1.bf16.msra.mxu0 0
        %538 = vmatprep.subr.bf16.mxu0 0
        %539 = vmatpush1.bf16.msra.mxu0 0
        %540 = vmatprep.mubr.bf16.mxu0 0
        %541 = vmatmul.mubr.bf16.gmra.mrb[0].mxu0 %v485
        %v542 = vpop.f32.mrb[0].mxu0
        %v543 = vadd.f32 %v429, %v542
        %v544 = vpop.f32.mrb[0].mxu0
        %v545 = vpop.f32.mrb[0].mxu0
        %v546 = vadd.f32 %v429, %v545
        %v547 = vpop.f32.mrb[0].mxu0
        %548 = vmatprep.mubr.bf16.mxu0 0
        %549 = vmatmul.mubr.bf16.gmra.mrb[0].mxu0 %v488
        %v550 = vpop.f32.mrb[0].mxu0
        %v551 = vadd.f32 %v429, %v550
        %v552 = vpop.f32.mrb[0].mxu0
        %v553 = vpop.f32.mrb[0].mxu0
        %v554 = vadd.f32 %v429, %v553
        %v555 = vpop.f32.mrb[0].mxu0
        %556 = vmatprep.mubr.bf16.mxu0 0
        %557 = vmatmul.mubr.bf16.gmra.mrb[0].mxu0 %v491
        %v558 = vpop.f32.mrb[0].mxu0
        %v559 = vadd.f32 %v429, %v558
        %v560 = vpop.f32.mrb[0].mxu0
        %v561 = vpop.f32.mrb[0].mxu0
        %v562 = vadd.f32 %v429, %v561
        %v563 = vpop.f32.mrb[0].mxu0
        %564 = vmatprep.mubr.bf16.mxu0 0
        %565 = vmatmul.mubr.bf16.gmra.mrb[0].mxu0 %v494
        %v566 = vpop.f32.mrb[0].mxu0
        %v567 = vadd.f32 %v429, %v566
        %v568 = vpop.f32.mrb[0].mxu0
        %v569 = vpop.f32.mrb[0].mxu0
        %v570 = vadd.f32 %v429, %v569
        %v571 = vpop.f32.mrb[0].mxu0
        %572 = vmatprep.mubr.bf16.mxu0 0
        %573 = vmatmul.mubr.bf16.gmra.mrb[0].mxu0 %v497
        %v574 = vpop.f32.mrb[0].mxu0
        %v575 = vadd.f32 %v429, %v574
        %v576 = vpop.f32.mrb[0].mxu0
        %v577 = vpop.f32.mrb[0].mxu0
        %v578 = vadd.f32 %v429, %v577
        %v579 = vpop.f32.mrb[0].mxu0
        %580 = vmatprep.mubr.bf16.mxu0 0
        %581 = vmatmul.mubr.bf16.gmra.mrb[0].mxu0 %v500
        %v582 = vpop.f32.mrb[0].mxu0
        %v583 = vadd.f32 %v429, %v582
        %v584 = vpop.f32.mrb[0].mxu0
        %v585 = vpop.f32.mrb[0].mxu0
        %v586 = vadd.f32 %v429, %v585
        %v587 = vpop.f32.mrb[0].mxu0
        %588 = vmatprep.mubr.bf16.mxu0 0
        %589 = vmatmul.mubr.bf16.gmra.mrb[0].mxu0 %v503
        %v590 = vpop.f32.mrb[0].mxu0
        %v591 = vadd.f32 %v429, %v590
        %v592 = vpop.f32.mrb[0].mxu0
        %v593 = vpop.f32.mrb[0].mxu0
        %v594 = vadd.f32 %v429, %v593
        %v595 = vpop.f32.mrb[0].mxu0
        %596 = vmatprep.mubr.bf16.mxu0 0
        %597 = vmatmul.mubr.bf16.gmra.mrb[0].mxu0 %v506
        %v598 = vpop.f32.mrb[0].mxu0
        %v599 = vadd.f32 %v429, %v598
        %v600 = vpop.f32.mrb[0].mxu0
        %v601 = vpop.f32.mrb[0].mxu0
        %v602 = vadd.f32 %v429, %v601
        %v603 = vpop.f32.mrb[0].mxu0
        %604 = vdwg.mxu0
        %v605 = vmax.f32 %v543, 0.0
        %v606 = vmax.f32 %v546, 0.0
        %v607 = vmax.f32 %v551, 0.0
        %v608 = vmax.f32 %v554, 0.0
        %v609 = vmax.f32 %v559, 0.0
        %v610 = vmax.f32 %v562, 0.0
        %v611 = vmax.f32 %v567, 0.0
        %v612 = vmax.f32 %v570, 0.0
        %v613 = vmax.f32 %v575, 0.0
        %v614 = vmax.f32 %v578, 0.0
        %v615 = vmax.f32 %v583, 0.0
        %v616 = vmax.f32 %v586, 0.0
        %v617 = vmax.f32 %v591, 0.0
        %v618 = vmax.f32 %v594, 0.0
        %v619 = vmax.f32 %v599, 0.0
        %v620 = vmax.f32 %v602, 0.0
        %v621 = vpack.c.bf16 %v606, %v605
        %v622 = vpack.c.bf16 %v608, %v607
        %v623 = vpack.c.bf16 %v610, %v609
        %v624 = vpack.c.bf16 %v612, %v611
        %v625 = vpack.c.bf16 %v614, %v613
        %v626 = vpack.c.bf16 %v616, %v615
        %v627 = vpack.c.bf16 %v618, %v617
        %v628 = vpack.c.bf16 %v620, %v619
        %v629 = vld [vmem:[#allocation2] sm:$0xf]
        %v630 = vld [vmem:[#allocation2 + $0x4] sm:$0xf]
        %v631 = vld [vmem:[#allocation2 + $0x8] sm:$0xf]
        %v632 = vld [vmem:[#allocation2 + $0xc] sm:$0xf]
        %v633 = vld [vmem:[#allocation2 + $0x10] sm:$0xf]
        %v634 = vld [vmem:[#allocation2 + $0x14] sm:$0xf]
        %v635 = vld [vmem:[#allocation2 + $0x18] sm:$0xf]
        %v636 = vld [vmem:[#allocation2 + $0x1c] sm:$0xf]
        %v637 = vld [vmem:[#allocation2 + $0x20] sm:$0xf]
        %v638 = vld [vmem:[#allocation2 + $0x24] sm:$0xf]
        %v639 = vld [vmem:[#allocation2 + $0x28] sm:$0xf]
        %v640 = vld [vmem:[#allocation2 + $0x2c] sm:$0xf]
        %v641 = vld [vmem:[#allocation2 + $0x30] sm:$0xf]
        %v642 = vld [vmem:[#allocation2 + $0x34] sm:$0xf]
        %v643 = vld [vmem:[#allocation2 + $0x38] sm:$0xf]
        %v644 = vld [vmem:[#allocation2 + $0x3c] sm:$0xf]
        %v645 = vld [vmem:[%s4] sm:$0x1]
        %v647 = vlaneseq
        %v648 = vshrl.u32 %v647, 7
        %v649 = vsub.s32 0, %v648
        %v650 = vrot.slane %v645, %v649
        %v668 = vunpack.c.l.b16 %v629
        %v669 = vunpack.c.l.b16 %v630
        %v670 = vunpack.c.l.b16 %v631
        %v671 = vunpack.c.l.b16 %v632
        %v672 = vunpack.c.l.b16 %v633
        %v673 = vunpack.c.l.b16 %v634
        %v674 = vunpack.c.l.b16 %v635
        %v675 = vunpack.c.l.b16 %v636
        %v676 = vunpack.c.l.b16 %v637
        %v677 = vunpack.c.l.b16 %v638
        %v678 = vunpack.c.l.b16 %v639
        %v679 = vunpack.c.l.b16 %v640
        %v680 = vunpack.c.l.b16 %v641
        %v681 = vunpack.c.l.b16 %v642
        %v682 = vunpack.c.l.b16 %v643
        %v683 = vunpack.c.l.b16 %v644
        %v684 = vpack.c.b16 %v669, %v668
        %v685 = vpack.c.b16 %v671, %v670
        %v686 = vpack.c.b16 %v673, %v672
        %v687 = vpack.c.b16 %v675, %v674
        %v688 = vpack.c.b16 %v677, %v676
        %v689 = vpack.c.b16 %v679, %v678
        %v690 = vpack.c.b16 %v681, %v680
        %v691 = vpack.c.b16 %v683, %v682
        %700 = vmatprep.subr.bf16.mxu0 0
        %701 = vmatpush1.bf16.msra.mxu0 %v684
        %702 = vmatprep.subr.bf16.mxu0 0
        %703 = vmatpush1.bf16.msra.mxu0 %v685
        %704 = vmatprep.subr.bf16.mxu0 0
        %705 = vmatpush1.bf16.msra.mxu0 %v686
        %706 = vmatprep.subr.bf16.mxu0 0
        %707 = vmatpush1.bf16.msra.mxu0 %v687
        %708 = vmatprep.subr.bf16.mxu0 0
        %709 = vmatpush1.bf16.msra.mxu0 %v688
        %710 = vmatprep.subr.bf16.mxu0 0
        %711 = vmatpush1.bf16.msra.mxu0 %v689
        %712 = vmatprep.subr.bf16.mxu0 0
        %713 = vmatpush1.bf16.msra.mxu0 %v690
        %714 = vmatprep.subr.bf16.mxu0 0
        %715 = vmatpush1.bf16.msra.mxu0 %v691
        %716 = vmatprep.subr.bf16.mxu0 0
        %717 = vmatpush1.bf16.msra.mxu0 0
        %718 = vmatprep.subr.bf16.mxu0 0
        %719 = vmatpush1.bf16.msra.mxu0 0
        %720 = vmatprep.subr.bf16.mxu0 0
        %721 = vmatpush1.bf16.msra.mxu0 0
        %722 = vmatprep.subr.bf16.mxu0 0
        %723 = vmatpush1.bf16.msra.mxu0 0
        %724 = vmatprep.subr.bf16.mxu0 0
        %725 = vmatpush1.bf16.msra.mxu0 0
        %726 = vmatprep.subr.bf16.mxu0 0
        %727 = vmatpush1.bf16.msra.mxu0 0
        %728 = vmatprep.subr.bf16.mxu0 0
        %729 = vmatpush1.bf16.msra.mxu0 0
        %730 = vmatprep.subr.bf16.mxu0 0
        %731 = vmatpush1.bf16.msra.mxu0 0
        %732 = vmatprep.mubr.bf16.mxu0 0
        %733 = vmatmul.mubr.bf16.gmra.mrb[0].mxu0 %v621
        %v734 = vpop.f32.mrb[0].mxu0
        %v735 = vadd.f32 %v650, %v734
        %v736 = vpop.f32.mrb[0].mxu0
        %v737 = vpop.f32.mrb[0].mxu0
        %v738 = vadd.f32 %v650, %v737
        %v739 = vpop.f32.mrb[0].mxu0
        %740 = vmatprep.mubr.bf16.mxu0 0
        %741 = vmatmul.mubr.bf16.gmra.mrb[0].mxu0 %v622
        %v742 = vpop.f32.mrb[0].mxu0
        %v743 = vadd.f32 %v650, %v742
        %v744 = vpop.f32.mrb[0].mxu0
        %v745 = vpop.f32.mrb[0].mxu0
        %v746 = vadd.f32 %v650, %v745
        %v747 = vpop.f32.mrb[0].mxu0
        %748 = vmatprep.mubr.bf16.mxu0 0
        %749 = vmatmul.mubr.bf16.gmra.mrb[0].mxu0 %v623
        %v750 = vpop.f32.mrb[0].mxu0
        %v751 = vadd.f32 %v650, %v750
        %v752 = vpop.f32.mrb[0].mxu0
        %v753 = vpop.f32.mrb[0].mxu0
        %v754 = vadd.f32 %v650, %v753
        %v755 = vpop.f32.mrb[0].mxu0
        %756 = vmatprep.mubr.bf16.mxu0 0
        %757 = vmatmul.mubr.bf16.gmra.mrb[0].mxu0 %v624
        %v758 = vpop.f32.mrb[0].mxu0
        %v759 = vadd.f32 %v650, %v758
        %v760 = vpop.f32.mrb[0].mxu0
        %v761 = vpop.f32.mrb[0].mxu0
        %v762 = vadd.f32 %v650, %v761
        %v763 = vpop.f32.mrb[0].mxu0
        %764 = vmatprep.mubr.bf16.mxu0 0
        %765 = vmatmul.mubr.bf16.gmra.mrb[0].mxu0 %v625
        %v766 = vpop.f32.mrb[0].mxu0
        %v767 = vadd.f32 %v650, %v766
        %v768 = vpop.f32.mrb[0].mxu0
        %v769 = vpop.f32.mrb[0].mxu0
        %v770 = vadd.f32 %v650, %v769
        %v771 = vpop.f32.mrb[0].mxu0
        %772 = vmatprep.mubr.bf16.mxu0 0
        %773 = vmatmul.mubr.bf16.gmra.mrb[0].mxu0 %v626
        %v774 = vpop.f32.mrb[0].mxu0
        %v775 = vadd.f32 %v650, %v774
        %v776 = vpop.f32.mrb[0].mxu0
        %v777 = vpop.f32.mrb[0].mxu0
        %v778 = vadd.f32 %v650, %v777
        %v779 = vpop.f32.mrb[0].mxu0
        %780 = vmatprep.mubr.bf16.mxu0 0
        %781 = vmatmul.mubr.bf16.gmra.mrb[0].mxu0 %v627
        %v782 = vpop.f32.mrb[0].mxu0
        %v783 = vadd.f32 %v650, %v782
        %v784 = vpop.f32.mrb[0].mxu0
        %v785 = vpop.f32.mrb[0].mxu0
        %v786 = vadd.f32 %v650, %v785
        %v787 = vpop.f32.mrb[0].mxu0
        %788 = vmatprep.mubr.bf16.mxu0 0
        %789 = vmatmul.mubr.bf16.gmra.mrb[0].mxu0 %v628
        %v790 = vpop.f32.mrb[0].mxu0
        %v791 = vadd.f32 %v650, %v790
        %v792 = vpop.f32.mrb[0].mxu0
        %v793 = vpop.f32.mrb[0].mxu0
        %v794 = vadd.f32 %v650, %v793
        %v795 = vpop.f32.mrb[0].mxu0
        %796 = vdwg.mxu0
        %v797 = vmax.f32 %v735, 0.0
        %v798 = vmax.f32 %v738, 0.0
        %v799 = vmax.f32 %v743, 0.0
        %v800 = vmax.f32 %v746, 0.0
        %v801 = vmax.f32 %v751, 0.0
        %v802 = vmax.f32 %v754, 0.0
        %v803 = vmax.f32 %v759, 0.0
        %v804 = vmax.f32 %v762, 0.0
        %v805 = vmax.f32 %v767, 0.0
        %v806 = vmax.f32 %v770, 0.0
        %v807 = vmax.f32 %v775, 0.0
        %v808 = vmax.f32 %v778, 0.0
        %v809 = vmax.f32 %v783, 0.0
        %v810 = vmax.f32 %v786, 0.0
        %v811 = vmax.f32 %v791, 0.0
        %v812 = vmax.f32 %v794, 0.0
        %v813 = vpack.c.bf16 %v798, %v797
        %v814 = vpack.c.bf16 %v800, %v799
        %v815 = vpack.c.bf16 %v802, %v801
        %v816 = vpack.c.bf16 %v804, %v803
        %v817 = vpack.c.bf16 %v806, %v805
        %v818 = vpack.c.bf16 %v808, %v807
        %v819 = vpack.c.bf16 %v810, %v809
        %v820 = vpack.c.bf16 %v812, %v811
        %v821 = vld [vmem:[%s5] sm:$0xff]
        %v822 = vld [vmem:[%s5 + $0x8] sm:$0xff]
        %v823 = vld [vmem:[%s5 + $0x10] sm:$0xff]
        %v824 = vld [vmem:[%s5 + $0x18] sm:$0xff]
        %v825 = vld [vmem:[%s5 + $0x20] sm:$0xff]
        %v826 = vld [vmem:[%s5 + $0x28] sm:$0xff]
        %v827 = vld [vmem:[%s5 + $0x30] sm:$0xff]
        %v828 = vld [vmem:[%s5 + $0x38] sm:$0xff]
        %v829 = vld [vmem:[%s5 + $0x40] sm:$0xff]
        %v830 = vld [vmem:[%s5 + $0x48] sm:$0xff]
        %v831 = vld [vmem:[%s5 + $0x50] sm:$0xff]
        %v832 = vld [vmem:[%s5 + $0x58] sm:$0xff]
        %v833 = vld [vmem:[%s5 + $0x60] sm:$0xff]
        %v834 = vld [vmem:[%s5 + $0x68] sm:$0xff]
        %v835 = vld [vmem:[%s5 + $0x70] sm:$0xff]
        %v836 = vld [vmem:[%s5 + $0x78] sm:$0xff]
        %v837 = vld [vmem:[%s6] sm:$0x3]
        %v839 = vlaneseq
        %v840 = vshrl.u32 %v839, 7
        %v841 = vsub.s32 0, %v840
        %v842 = vrot.slane %v837, %v841
        %v843 = vlaneseq
        %v844 = vshrl.u32 %v843, 7
        %v845 = vsub.s32 1, %v844
        %v846 = vrot.slane %v837, %v845
        %v865 = vunpack.c.l.b16 %v821
        %v866 = vunpack.c.h.b16 %v821
        %v867 = vunpack.c.l.b16 %v822
        %v868 = vunpack.c.h.b16 %v822
        %v869 = vunpack.c.l.b16 %v823
        %v870 = vunpack.c.h.b16 %v823
        %v871 = vunpack.c.l.b16 %v824
        %v872 = vunpack.c.h.b16 %v824
        %v873 = vunpack.c.l.b16 %v825
        %v874 = vunpack.c.h.b16 %v825
        %v875 = vunpack.c.l.b16 %v826
        %v876 = vunpack.c.h.b16 %v826
        %v877 = vunpack.c.l.b16 %v827
        %v878 = vunpack.c.h.b16 %v827
        %v879 = vunpack.c.l.b16 %v828
        %v880 = vunpack.c.h.b16 %v828
        %v881 = vunpack.c.l.b16 %v829
        %v882 = vunpack.c.h.b16 %v829
        %v883 = vunpack.c.l.b16 %v830
        %v884 = vunpack.c.h.b16 %v830
        %v885 = vunpack.c.l.b16 %v831
        %v886 = vunpack.c.h.b16 %v831
        %v887 = vunpack.c.l.b16 %v832
        %v888 = vunpack.c.h.b16 %v832
        %v889 = vunpack.c.l.b16 %v833
        %v890 = vunpack.c.h.b16 %v833
        %v891 = vunpack.c.l.b16 %v834
        %v892 = vunpack.c.h.b16 %v834
        %v893 = vunpack.c.l.b16 %v835
        %v894 = vunpack.c.h.b16 %v835
        %v895 = vunpack.c.l.b16 %v836
        %v896 = vunpack.c.h.b16 %v836
        %v897 = vpack.c.b16 %v867, %v865
        %v898 = vpack.c.b16 %v868, %v866
        %v899 = vpack.c.b16 %v871, %v869
        %v900 = vpack.c.b16 %v872, %v870
        %v901 = vpack.c.b16 %v875, %v873
        %v902 = vpack.c.b16 %v876, %v874
        %v903 = vpack.c.b16 %v879, %v877
        %v904 = vpack.c.b16 %v880, %v878
        %v905 = vpack.c.b16 %v883, %v881
        %v906 = vpack.c.b16 %v884, %v882
        %v907 = vpack.c.b16 %v887, %v885
        %v908 = vpack.c.b16 %v888, %v886
        %v909 = vpack.c.b16 %v891, %v889
        %v910 = vpack.c.b16 %v892, %v890
        %v911 = vpack.c.b16 %v895, %v893
        %v912 = vpack.c.b16 %v896, %v894
        %929 = vmatprep.subr.bf16.mxu0 %v898
        %930 = vmatpush1.bf16.msra.mxu0 %v897
        %931 = vmatprep.subr.bf16.mxu0 %v900
        %932 = vmatpush1.bf16.msra.mxu0 %v899
        %933 = vmatprep.subr.bf16.mxu0 %v902
        %934 = vmatpush1.bf16.msra.mxu0 %v901
        %935 = vmatprep.subr.bf16.mxu0 %v904
        %936 = vmatpush1.bf16.msra.mxu0 %v903
        %937 = vmatprep.subr.bf16.mxu0 %v906
        %938 = vmatpush1.bf16.msra.mxu0 %v905
        %939 = vmatprep.subr.bf16.mxu0 %v908
        %940 = vmatpush1.bf16.msra.mxu0 %v907
        %941 = vmatprep.subr.bf16.mxu0 %v910
        %942 = vmatpush1.bf16.msra.mxu0 %v909
        %943 = vmatprep.subr.bf16.mxu0 %v912
        %944 = vmatpush1.bf16.msra.mxu0 %v911
        %945 = vmatprep.subr.bf16.mxu0 0
        %946 = vmatpush1.bf16.msra.mxu0 0
        %947 = vmatprep.subr.bf16.mxu0 0
        %948 = vmatpush1.bf16.msra.mxu0 0
        %949 = vmatprep.subr.bf16.mxu0 0
        %950 = vmatpush1.bf16.msra.mxu0 0
        %951 = vmatprep.subr.bf16.mxu0 0
        %952 = vmatpush1.bf16.msra.mxu0 0
        %953 = vmatprep.subr.bf16.mxu0 0
        %954 = vmatpush1.bf16.msra.mxu0 0
        %955 = vmatprep.subr.bf16.mxu0 0
        %956 = vmatpush1.bf16.msra.mxu0 0
        %957 = vmatprep.subr.bf16.mxu0 0
        %958 = vmatpush1.bf16.msra.mxu0 0
        %959 = vmatprep.subr.bf16.mxu0 0
        %960 = vmatpush1.bf16.msra.mxu0 0
        %961 = vmatprep.mubr.bf16.mxu0 0
        %962 = vmatmul.mubr.bf16.gmra.mrb[0].mxu0 %v813
        %v963 = vpop.f32.mrb[0].mxu0
        %v964 = vadd.f32 %v842, %v963
        %v965 = vpop.f32.mrb[0].mxu0
        %v966 = vadd.f32 %v846, %v965
        %v967 = vpop.f32.mrb[0].mxu0
        %v968 = vadd.f32 %v842, %v967
        %v969 = vpop.f32.mrb[0].mxu0
        %v970 = vadd.f32 %v846, %v969
        %971 = vmatprep.mubr.bf16.mxu0 0
        %972 = vmatmul.mubr.bf16.gmra.mrb[0].mxu0 %v814
        %v973 = vpop.f32.mrb[0].mxu0
        %v974 = vadd.f32 %v842, %v973
        %v975 = vpop.f32.mrb[0].mxu0
        %v976 = vadd.f32 %v846, %v975
        %v977 = vpop.f32.mrb[0].mxu0
        %v978 = vadd.f32 %v842, %v977
        %v979 = vpop.f32.mrb[0].mxu0
        %v980 = vadd.f32 %v846, %v979
        %981 = vmatprep.mubr.bf16.mxu0 0
        %982 = vmatmul.mubr.bf16.gmra.mrb[0].mxu0 %v815
        %v983 = vpop.f32.mrb[0].mxu0
        %v984 = vadd.f32 %v842, %v983
        %v985 = vpop.f32.mrb[0].mxu0
        %v986 = vadd.f32 %v846, %v985
        %v987 = vpop.f32.mrb[0].mxu0
        %v988 = vadd.f32 %v842, %v987
        %v989 = vpop.f32.mrb[0].mxu0
        %v990 = vadd.f32 %v846, %v989
        %991 = vmatprep.mubr.bf16.mxu0 0
        %992 = vmatmul.mubr.bf16.gmra.mrb[0].mxu0 %v816
        %v993 = vpop.f32.mrb[0].mxu0
        %v994 = vadd.f32 %v842, %v993
        %v995 = vpop.f32.mrb[0].mxu0
        %v996 = vadd.f32 %v846, %v995
        %v997 = vpop.f32.mrb[0].mxu0
        %v998 = vadd.f32 %v842, %v997
        %v999 = vpop.f32.mrb[0].mxu0
        %v1000 = vadd.f32 %v846, %v999
        %1001 = vmatprep.mubr.bf16.mxu0 0
        %1002 = vmatmul.mubr.bf16.gmra.mrb[0].mxu0 %v817
        %v1003 = vpop.f32.mrb[0].mxu0
        %v1004 = vadd.f32 %v842, %v1003
        %v1005 = vpop.f32.mrb[0].mxu0
        %v1006 = vadd.f32 %v846, %v1005
        %v1007 = vpop.f32.mrb[0].mxu0
        %v1008 = vadd.f32 %v842, %v1007
        %v1009 = vpop.f32.mrb[0].mxu0
        %v1010 = vadd.f32 %v846, %v1009
        %1011 = vmatprep.mubr.bf16.mxu0 0
        %1012 = vmatmul.mubr.bf16.gmra.mrb[0].mxu0 %v818
        %v1013 = vpop.f32.mrb[0].mxu0
        %v1014 = vadd.f32 %v842, %v1013
        %v1015 = vpop.f32.mrb[0].mxu0
        %v1016 = vadd.f32 %v846, %v1015
        %v1017 = vpop.f32.mrb[0].mxu0
        %v1018 = vadd.f32 %v842, %v1017
        %v1019 = vpop.f32.mrb[0].mxu0
        %v1020 = vadd.f32 %v846, %v1019
        %1021 = vmatprep.mubr.bf16.mxu0 0
        %1022 = vmatmul.mubr.bf16.gmra.mrb[0].mxu0 %v819
        %v1023 = vpop.f32.mrb[0].mxu0
        %v1024 = vadd.f32 %v842, %v1023
        %v1025 = vpop.f32.mrb[0].mxu0
        %v1026 = vadd.f32 %v846, %v1025
        %v1027 = vpop.f32.mrb[0].mxu0
        %v1028 = vadd.f32 %v842, %v1027
        %v1029 = vpop.f32.mrb[0].mxu0
        %v1030 = vadd.f32 %v846, %v1029
        %1031 = vmatprep.mubr.bf16.mxu0 0
        %1032 = vmatmul.mubr.bf16.gmra.mrb[0].mxu0 %v820
        %v1033 = vpop.f32.mrb[0].mxu0
        %v1034 = vadd.f32 %v842, %v1033
        %v1035 = vpop.f32.mrb[0].mxu0
        %v1036 = vadd.f32 %v846, %v1035
        %v1037 = vpop.f32.mrb[0].mxu0
        %v1038 = vadd.f32 %v842, %v1037
        %v1039 = vpop.f32.mrb[0].mxu0
        %v1040 = vadd.f32 %v846, %v1039
        %1041 = vdwg.mxu0
        %1042 = vst [vmem:[%s386] sm:$0xff] %v964
        %1043 = vst [vmem:[%s386 + $0x8] sm:$0xff] %v966
        %1044 = vst [vmem:[%s386 + $0x10] sm:$0xff] %v968
        %1045 = vst [vmem:[%s386 + $0x18] sm:$0xff] %v970
        %1046 = vst [vmem:[%s386 + $0x20] sm:$0xff] %v974
        %1047 = vst [vmem:[%s386 + $0x28] sm:$0xff] %v976
        %1048 = vst [vmem:[%s386 + $0x30] sm:$0xff] %v978
        %1049 = vst [vmem:[%s386 + $0x38] sm:$0xff] %v980
        %1050 = vst [vmem:[%s386 + $0x40] sm:$0xff] %v984
        %1051 = vst [vmem:[%s386 + $0x48] sm:$0xff] %v986
        %1052 = vst [vmem:[%s386 + $0x50] sm:$0xff] %v988
        %1053 = vst [vmem:[%s386 + $0x58] sm:$0xff] %v990
        %1054 = vst [vmem:[%s386 + $0x60] sm:$0xff] %v994
        %1055 = vst [vmem:[%s386 + $0x68] sm:$0xff] %v996
        %1056 = vst [vmem:[%s386 + $0x70] sm:$0xff] %v998
        %1057 = vst [vmem:[%s386 + $0x78] sm:$0xff] %v1000
        %1058 = vst [vmem:[%s386 + $0x80] sm:$0xff] %v1004
        %1059 = vst [vmem:[%s386 + $0x88] sm:$0xff] %v1006
        %1060 = vst [vmem:[%s386 + $0x90] sm:$0xff] %v1008
        %1061 = vst [vmem:[%s386 + $0x98] sm:$0xff] %v1010
        %1062 = vst [vmem:[%s386 + $0xa0] sm:$0xff] %v1014
        %1063 = vst [vmem:[%s386 + $0xa8] sm:$0xff] %v1016
        %1064 = vst [vmem:[%s386 + $0xb0] sm:$0xff] %v1018
        %1065 = vst [vmem:[%s386 + $0xb8] sm:$0xff] %v1020
        %1066 = vst [vmem:[%s386 + $0xc0] sm:$0xff] %v1024
        %1067 = vst [vmem:[%s386 + $0xc8] sm:$0xff] %v1026
        %1068 = vst [vmem:[%s386 + $0xd0] sm:$0xff] %v1028
        %1069 = vst [vmem:[%s386 + $0xd8] sm:$0xff] %v1030
        %1070 = vst [vmem:[%s386 + $0xe0] sm:$0xff] %v1034
        %1071 = vst [vmem:[%s386 + $0xe8] sm:$0xff] %v1036
        %1072 = vst [vmem:[%s386 + $0xf0] sm:$0xff] %v1038
        %1073 = vst [vmem:[%s386 + $0xf8] sm:$0xff] %v1040
        %v1074 = vld [vmem:[%s349] sm:$0xff]
        %v1075 = vld [vmem:[%s349 + $0x8] sm:$0xff]
        %v1076 = vld [vmem:[%s349 + $0x10] sm:$0xff]
        %v1077 = vld [vmem:[%s349 + $0x18] sm:$0xff]
        %v1078 = vld [vmem:[%s349 + $0x20] sm:$0xff]
        %v1079 = vld [vmem:[%s349 + $0x28] sm:$0xff]
        %v1080 = vld [vmem:[%s349 + $0x30] sm:$0xff]
        %v1081 = vld [vmem:[%s349 + $0x38] sm:$0xff]
        %v1082 = vld [vmem:[%s349 + $0x40] sm:$0xff]
        %v1083 = vld [vmem:[%s349 + $0x48] sm:$0xff]
        %v1084 = vld [vmem:[%s349 + $0x50] sm:$0xff]
        %v1085 = vld [vmem:[%s349 + $0x58] sm:$0xff]
        %v1086 = vld [vmem:[%s349 + $0x60] sm:$0xff]
        %v1087 = vld [vmem:[%s349 + $0x68] sm:$0xff]
        %v1088 = vld [vmem:[%s349 + $0x70] sm:$0xff]
        %v1089 = vld [vmem:[%s349 + $0x78] sm:$0xff]
        %v1090 = vunpack.c.l.bf16 %v1074
        %v1091 = vunpack.c.h.bf16 %v1074
        %v1092 = vunpack.c.l.bf16 %v1075
        %v1093 = vunpack.c.h.bf16 %v1075
        %v1094 = vunpack.c.l.bf16 %v1076
        %v1095 = vunpack.c.h.bf16 %v1076
        %v1096 = vunpack.c.l.bf16 %v1077
        %v1097 = vunpack.c.h.bf16 %v1077
        %v1098 = vunpack.c.l.bf16 %v1078
        %v1099 = vunpack.c.h.bf16 %v1078
        %v1100 = vunpack.c.l.bf16 %v1079
        %v1101 = vunpack.c.h.bf16 %v1079
        %v1102 = vunpack.c.l.bf16 %v1080
        %v1103 = vunpack.c.h.bf16 %v1080
        %v1104 = vunpack.c.l.bf16 %v1081
        %v1105 = vunpack.c.h.bf16 %v1081
        %v1106 = vunpack.c.l.bf16 %v1082
        %v1107 = vunpack.c.h.bf16 %v1082
        %v1108 = vunpack.c.l.bf16 %v1083
        %v1109 = vunpack.c.h.bf16 %v1083
        %v1110 = vunpack.c.l.bf16 %v1084
        %v1111 = vunpack.c.h.bf16 %v1084
        %v1112 = vunpack.c.l.bf16 %v1085
        %v1113 = vunpack.c.h.bf16 %v1085
        %v1114 = vunpack.c.l.bf16 %v1086
        %v1115 = vunpack.c.h.bf16 %v1086
        %v1116 = vunpack.c.l.bf16 %v1087
        %v1117 = vunpack.c.h.bf16 %v1087
        %v1118 = vunpack.c.l.bf16 %v1088
        %v1119 = vunpack.c.h.bf16 %v1088
        %v1120 = vunpack.c.l.bf16 %v1089
        %v1121 = vunpack.c.h.bf16 %v1089
        %v1122 = vmax.f32 %v964, 0.0
        %v1123 = vmax.f32 %v966, 0.0
        %v1124 = vmax.f32 %v968, 0.0
        %v1125 = vmax.f32 %v970, 0.0
        %v1126 = vmax.f32 %v974, 0.0
        %v1127 = vmax.f32 %v976, 0.0
        %v1128 = vmax.f32 %v978, 0.0
        %v1129 = vmax.f32 %v980, 0.0
        %v1130 = vmax.f32 %v984, 0.0
        %v1131 = vmax.f32 %v986, 0.0
        %v1132 = vmax.f32 %v988, 0.0
        %v1133 = vmax.f32 %v990, 0.0
        %v1134 = vmax.f32 %v994, 0.0
        %v1135 = vmax.f32 %v996, 0.0
        %v1136 = vmax.f32 %v998, 0.0
        %v1137 = vmax.f32 %v1000, 0.0
        %v1138 = vmax.f32 %v1004, 0.0
        %v1139 = vmax.f32 %v1006, 0.0
        %v1140 = vmax.f32 %v1008, 0.0
        %v1141 = vmax.f32 %v1010, 0.0
        %v1142 = vmax.f32 %v1014, 0.0
        %v1143 = vmax.f32 %v1016, 0.0
        %v1144 = vmax.f32 %v1018, 0.0
        %v1145 = vmax.f32 %v1020, 0.0
        %v1146 = vmax.f32 %v1024, 0.0
        %v1147 = vmax.f32 %v1026, 0.0
        %v1148 = vmax.f32 %v1028, 0.0
        %v1149 = vmax.f32 %v1030, 0.0
        %v1150 = vmax.f32 %v1034, 0.0
        %v1151 = vmax.f32 %v1036, 0.0
        %v1152 = vmax.f32 %v1038, 0.0
        %v1153 = vmax.f32 %v1040, 0.0
        %v1154 = vmul.f32 %v964, %v1090
        %v1155 = vmul.f32 %v966, %v1091
        %v1156 = vmul.f32 %v968, %v1092
        %v1157 = vmul.f32 %v970, %v1093
        %v1158 = vmul.f32 %v974, %v1094
        %v1159 = vmul.f32 %v976, %v1095
        %v1160 = vmul.f32 %v978, %v1096
        %v1161 = vmul.f32 %v980, %v1097
        %v1162 = vmul.f32 %v984, %v1098
        %v1163 = vmul.f32 %v986, %v1099
        %v1164 = vmul.f32 %v988, %v1100
        %v1165 = vmul.f32 %v990, %v1101
        %v1166 = vmul.f32 %v994, %v1102
        %v1167 = vmul.f32 %v996, %v1103
        %v1168 = vmul.f32 %v998, %v1104
        %v1169 = vmul.f32 %v1000, %v1105
        %v1170 = vmul.f32 %v1004, %v1106
        %v1171 = vmul.f32 %v1006, %v1107
        %v1172 = vmul.f32 %v1008, %v1108
        %v1173 = vmul.f32 %v1010, %v1109
        %v1174 = vmul.f32 %v1014, %v1110
        %v1175 = vmul.f32 %v1016, %v1111
        %v1176 = vmul.f32 %v1018, %v1112
        %v1177 = vmul.f32 %v1020, %v1113
        %v1178 = vmul.f32 %v1024, %v1114
        %v1179 = vmul.f32 %v1026, %v1115
        %v1180 = vmul.f32 %v1028, %v1116
        %v1181 = vmul.f32 %v1030, %v1117
        %v1182 = vmul.f32 %v1034, %v1118
        %v1183 = vmul.f32 %v1036, %v1119
        %v1184 = vmul.f32 %v1038, %v1120
        %v1185 = vmul.f32 %v1040, %v1121
        %v1186 = vsub.f32 %v1122, %v1154
        %v1187 = vsub.f32 %v1123, %v1155
        %v1188 = vsub.f32 %v1124, %v1156
        %v1189 = vsub.f32 %v1125, %v1157
        %v1190 = vsub.f32 %v1126, %v1158
        %v1191 = vsub.f32 %v1127, %v1159
        %v1192 = vsub.f32 %v1128, %v1160
        %v1193 = vsub.f32 %v1129, %v1161
        %v1194 = vsub.f32 %v1130, %v1162
        %v1195 = vsub.f32 %v1131, %v1163
        %v1196 = vsub.f32 %v1132, %v1164
        %v1197 = vsub.f32 %v1133, %v1165
        %v1198 = vsub.f32 %v1134, %v1166
        %v1199 = vsub.f32 %v1135, %v1167
        %v1200 = vsub.f32 %v1136, %v1168
        %v1201 = vsub.f32 %v1137, %v1169
        %v1202 = vsub.f32 %v1138, %v1170
        %v1203 = vsub.f32 %v1139, %v1171
        %v1204 = vsub.f32 %v1140, %v1172
        %v1205 = vsub.f32 %v1141, %v1173
        %v1206 = vsub.f32 %v1142, %v1174
        %v1207 = vsub.f32 %v1143, %v1175
        %v1208 = vsub.f32 %v1144, %v1176
        %v1209 = vsub.f32 %v1145, %v1177
        %v1210 = vsub.f32 %v1146, %v1178
        %v1211 = vsub.f32 %v1147, %v1179
        %v1212 = vsub.f32 %v1148, %v1180
        %v1213 = vsub.f32 %v1149, %v1181
        %v1214 = vsub.f32 %v1150, %v1182
        %v1215 = vsub.f32 %v1151, %v1183
        %v1216 = vsub.f32 %v1152, %v1184
        %v1217 = vsub.f32 %v1153, %v1185
        %v1218 = vand.u32 2147483647, %v964
        %v1219 = vand.u32 2147483647, %v966
        %v1220 = vand.u32 2147483647, %v968
        %v1221 = vand.u32 2147483647, %v970
        %v1222 = vand.u32 2147483647, %v974
        %v1223 = vand.u32 2147483647, %v976
        %v1224 = vand.u32 2147483647, %v978
        %v1225 = vand.u32 2147483647, %v980
        %v1226 = vand.u32 2147483647, %v984
        %v1227 = vand.u32 2147483647, %v986
        %v1228 = vand.u32 2147483647, %v988
        %v1229 = vand.u32 2147483647, %v990
        %v1230 = vand.u32 2147483647, %v994
        %v1231 = vand.u32 2147483647, %v996
        %v1232 = vand.u32 2147483647, %v998
        %v1233 = vand.u32 2147483647, %v1000
        %v1234 = vand.u32 2147483647, %v1004
        %v1235 = vand.u32 2147483647, %v1006
        %v1236 = vand.u32 2147483647, %v1008
        %v1237 = vand.u32 2147483647, %v1010
        %v1238 = vand.u32 2147483647, %v1014
        %v1239 = vand.u32 2147483647, %v1016
        %v1240 = vand.u32 2147483647, %v1018
        %v1241 = vand.u32 2147483647, %v1020
        %v1242 = vand.u32 2147483647, %v1024
        %v1243 = vand.u32 2147483647, %v1026
        %v1244 = vand.u32 2147483647, %v1028
        %v1245 = vand.u32 2147483647, %v1030
        %v1246 = vand.u32 2147483647, %v1034
        %v1247 = vand.u32 2147483647, %v1036
        %v1248 = vand.u32 2147483647, %v1038
        %v1249 = vand.u32 2147483647, %v1040
        %v1250 = vsub.f32 0.0, %v1218
        %v1251 = vsub.f32 0.0, %v1219
        %v1252 = vsub.f32 0.0, %v1220
        %v1253 = vsub.f32 0.0, %v1221
        %v1254 = vsub.f32 0.0, %v1222
        %v1255 = vsub.f32 0.0, %v1223
        %v1256 = vsub.f32 0.0, %v1224
        %v1257 = vsub.f32 0.0, %v1225
        %v1258 = vsub.f32 0.0, %v1226
        %v1259 = vsub.f32 0.0, %v1227
        %v1260 = vsub.f32 0.0, %v1228
        %v1261 = vsub.f32 0.0, %v1229
        %v1262 = vsub.f32 0.0, %v1230
        %v1263 = vsub.f32 0.0, %v1231
        %v1264 = vsub.f32 0.0, %v1232
        %v1265 = vsub.f32 0.0, %v1233
        %v1266 = vsub.f32 0.0, %v1234
        %v1267 = vsub.f32 0.0, %v1235
        %v1268 = vsub.f32 0.0, %v1236
        %v1269 = vsub.f32 0.0, %v1237
        %v1270 = vsub.f32 0.0, %v1238
        %v1271 = vsub.f32 0.0, %v1239
        %v1272 = vsub.f32 0.0, %v1240
        %v1273 = vsub.f32 0.0, %v1241
        %v1274 = vsub.f32 0.0, %v1242
        %v1275 = vsub.f32 0.0, %v1243
        %v1276 = vsub.f32 0.0, %v1244
        %v1277 = vsub.f32 0.0, %v1245
        %v1278 = vsub.f32 0.0, %v1246
        %v1279 = vsub.f32 0.0, %v1247
        %v1280 = vsub.f32 0.0, %v1248
        %v1281 = vsub.f32 0.0, %v1249
        %v1282 = vmul.f32 %v1250, 1.442695
        %v1283 = vpow.pop %v1282
        %v1284 = vmul.f32 %v1251, 1.442695
        %v1285 = vpow.pop %v1284
        %v1286 = vmul.f32 %v1252, 1.442695
        %v1287 = vpow.pop %v1286
        %v1288 = vmul.f32 %v1253, 1.442695
        %v1289 = vpow.pop %v1288
        %v1290 = vmul.f32 %v1254, 1.442695
        %v1291 = vpow.pop %v1290
        %v1292 = vmul.f32 %v1255, 1.442695
        %v1293 = vpow.pop %v1292
        %v1294 = vmul.f32 %v1256, 1.442695
        %v1295 = vpow.pop %v1294
        %v1296 = vmul.f32 %v1257, 1.442695
        %v1297 = vpow.pop %v1296
        %v1298 = vmul.f32 %v1258, 1.442695
        %v1299 = vpow.pop %v1298
        %v1300 = vmul.f32 %v1259, 1.442695
        %v1301 = vpow.pop %v1300
        %v1302 = vmul.f32 %v1260, 1.442695
        %v1303 = vpow.pop %v1302
        %v1304 = vmul.f32 %v1261, 1.442695
        %v1305 = vpow.pop %v1304
        %v1306 = vmul.f32 %v1262, 1.442695
        %v1307 = vpow.pop %v1306
        %v1308 = vmul.f32 %v1263, 1.442695
        %v1309 = vpow.pop %v1308
        %v1310 = vmul.f32 %v1264, 1.442695
        %v1311 = vpow.pop %v1310
        %v1312 = vmul.f32 %v1265, 1.442695
        %v1313 = vpow.pop %v1312
        %v1314 = vmul.f32 %v1266, 1.442695
        %v1315 = vpow.pop %v1314
        %v1316 = vmul.f32 %v1267, 1.442695
        %v1317 = vpow.pop %v1316
        %v1318 = vmul.f32 %v1268, 1.442695
        %v1319 = vpow.pop %v1318
        %v1320 = vmul.f32 %v1269, 1.442695
        %v1321 = vpow.pop %v1320
        %v1322 = vmul.f32 %v1270, 1.442695
        %v1323 = vpow.pop %v1322
        %v1324 = vmul.f32 %v1271, 1.442695
        %v1325 = vpow.pop %v1324
        %v1326 = vmul.f32 %v1272, 1.442695
        %v1327 = vpow.pop %v1326
        %v1328 = vmul.f32 %v1273, 1.442695
        %v1329 = vpow.pop %v1328
        %v1330 = vmul.f32 %v1274, 1.442695
        %v1331 = vpow.pop %v1330
        %v1332 = vmul.f32 %v1275, 1.442695
        %v1333 = vpow.pop %v1332
        %v1334 = vmul.f32 %v1276, 1.442695
        %v1335 = vpow.pop %v1334
        %v1336 = vmul.f32 %v1277, 1.442695
        %v1337 = vpow.pop %v1336
        %v1338 = vmul.f32 %v1278, 1.442695
        %v1339 = vpow.pop %v1338
        %v1340 = vmul.f32 %v1279, 1.442695
        %v1341 = vpow.pop %v1340
        %v1342 = vmul.f32 %v1280, 1.442695
        %v1343 = vpow.pop %v1342
        %v1344 = vmul.f32 %v1281, 1.442695
        %v1345 = vpow.pop %v1344
        %v1346 = vadd.f32 %v1283, 1.0
        %v1347 = vlog2.pop %v1346
        %v1348 = vmul.f32 %v1347, 0.6931472
        %v1349 = vmul.f32 -0.5, %v1283
        %v1350 = vadd.f32 %v1349, 1.0
        %v1351 = vmul.f32 %v1350, %v1283
        %v1352 = vand.u32 2147483647, %v1283
        %vm1353 = vcmp.lt.f32.partialorder %v1352, 0.0004427343
        %v1354 = vsel %vm1353, %v1351, %v1348
        %v1355 = vadd.f32 %v1285, 1.0
        %v1356 = vlog2.pop %v1355
        %v1357 = vmul.f32 %v1356, 0.6931472
        %v1358 = vmul.f32 -0.5, %v1285
        %v1359 = vadd.f32 %v1358, 1.0
        %v1360 = vmul.f32 %v1359, %v1285
        %v1361 = vand.u32 2147483647, %v1285
        %vm1362 = vcmp.lt.f32.partialorder %v1361, 0.0004427343
        %v1363 = vsel %vm1362, %v1360, %v1357
        %v1364 = vadd.f32 %v1287, 1.0
        %v1365 = vlog2.pop %v1364
        %v1366 = vmul.f32 %v1365, 0.6931472
        %v1367 = vmul.f32 -0.5, %v1287
        %v1368 = vadd.f32 %v1367, 1.0
        %v1369 = vmul.f32 %v1368, %v1287
        %v1370 = vand.u32 2147483647, %v1287
        %vm1371 = vcmp.lt.f32.partialorder %v1370, 0.0004427343
        %v1372 = vsel %vm1371, %v1369, %v1366
        %v1373 = vadd.f32 %v1289, 1.0
        %v1374 = vlog2.pop %v1373
        %v1375 = vmul.f32 %v1374, 0.6931472
        %v1376 = vmul.f32 -0.5, %v1289
        %v1377 = vadd.f32 %v1376, 1.0
        %v1378 = vmul.f32 %v1377, %v1289
        %v1379 = vand.u32 2147483647, %v1289
        %vm1380 = vcmp.lt.f32.partialorder %v1379, 0.0004427343
        %v1381 = vsel %vm1380, %v1378, %v1375
        %v1382 = vadd.f32 %v1291, 1.0
        %v1383 = vlog2.pop %v1382
        %v1384 = vmul.f32 %v1383, 0.6931472
        %v1385 = vmul.f32 -0.5, %v1291
        %v1386 = vadd.f32 %v1385, 1.0
        %v1387 = vmul.f32 %v1386, %v1291
        %v1388 = vand.u32 2147483647, %v1291
        %vm1389 = vcmp.lt.f32.partialorder %v1388, 0.0004427343
        %v1390 = vsel %vm1389, %v1387, %v1384
        %v1391 = vadd.f32 %v1293, 1.0
        %v1392 = vlog2.pop %v1391
        %v1393 = vmul.f32 %v1392, 0.6931472
        %v1394 = vmul.f32 -0.5, %v1293
        %v1395 = vadd.f32 %v1394, 1.0
        %v1396 = vmul.f32 %v1395, %v1293
        %v1397 = vand.u32 2147483647, %v1293
        %vm1398 = vcmp.lt.f32.partialorder %v1397, 0.0004427343
        %v1399 = vsel %vm1398, %v1396, %v1393
        %v1400 = vadd.f32 %v1295, 1.0
        %v1401 = vlog2.pop %v1400
        %v1402 = vmul.f32 %v1401, 0.6931472
        %v1403 = vmul.f32 -0.5, %v1295
        %v1404 = vadd.f32 %v1403, 1.0
        %v1405 = vmul.f32 %v1404, %v1295
        %v1406 = vand.u32 2147483647, %v1295
        %vm1407 = vcmp.lt.f32.partialorder %v1406, 0.0004427343
        %v1408 = vsel %vm1407, %v1405, %v1402
        %v1409 = vadd.f32 %v1297, 1.0
        %v1410 = vlog2.pop %v1409
        %v1411 = vmul.f32 %v1410, 0.6931472
        %v1412 = vmul.f32 -0.5, %v1297
        %v1413 = vadd.f32 %v1412, 1.0
        %v1414 = vmul.f32 %v1413, %v1297
        %v1415 = vand.u32 2147483647, %v1297
        %vm1416 = vcmp.lt.f32.partialorder %v1415, 0.0004427343
        %v1417 = vsel %vm1416, %v1414, %v1411
        %v1418 = vadd.f32 %v1299, 1.0
        %v1419 = vlog2.pop %v1418
        %v1420 = vmul.f32 %v1419, 0.6931472
        %v1421 = vmul.f32 -0.5, %v1299
        %v1422 = vadd.f32 %v1421, 1.0
        %v1423 = vmul.f32 %v1422, %v1299
        %v1424 = vand.u32 2147483647, %v1299
        %vm1425 = vcmp.lt.f32.partialorder %v1424, 0.0004427343
        %v1426 = vsel %vm1425, %v1423, %v1420
        %v1427 = vadd.f32 %v1301, 1.0
        %v1428 = vlog2.pop %v1427
        %v1429 = vmul.f32 %v1428, 0.6931472
        %v1430 = vmul.f32 -0.5, %v1301
        %v1431 = vadd.f32 %v1430, 1.0
        %v1432 = vmul.f32 %v1431, %v1301
        %v1433 = vand.u32 2147483647, %v1301
        %vm1434 = vcmp.lt.f32.partialorder %v1433, 0.0004427343
        %v1435 = vsel %vm1434, %v1432, %v1429
        %v1436 = vadd.f32 %v1303, 1.0
        %v1437 = vlog2.pop %v1436
        %v1438 = vmul.f32 %v1437, 0.6931472
        %v1439 = vmul.f32 -0.5, %v1303
        %v1440 = vadd.f32 %v1439, 1.0
        %v1441 = vmul.f32 %v1440, %v1303
        %v1442 = vand.u32 2147483647, %v1303
        %vm1443 = vcmp.lt.f32.partialorder %v1442, 0.0004427343
        %v1444 = vsel %vm1443, %v1441, %v1438
        %v1445 = vadd.f32 %v1305, 1.0
        %v1446 = vlog2.pop %v1445
        %v1447 = vmul.f32 %v1446, 0.6931472
        %v1448 = vmul.f32 -0.5, %v1305
        %v1449 = vadd.f32 %v1448, 1.0
        %v1450 = vmul.f32 %v1449, %v1305
        %v1451 = vand.u32 2147483647, %v1305
        %vm1452 = vcmp.lt.f32.partialorder %v1451, 0.0004427343
        %v1453 = vsel %vm1452, %v1450, %v1447
        %v1454 = vadd.f32 %v1307, 1.0
        %v1455 = vlog2.pop %v1454
        %v1456 = vmul.f32 %v1455, 0.6931472
        %v1457 = vmul.f32 -0.5, %v1307
        %v1458 = vadd.f32 %v1457, 1.0
        %v1459 = vmul.f32 %v1458, %v1307
        %v1460 = vand.u32 2147483647, %v1307
        %vm1461 = vcmp.lt.f32.partialorder %v1460, 0.0004427343
        %v1462 = vsel %vm1461, %v1459, %v1456
        %v1463 = vadd.f32 %v1309, 1.0
        %v1464 = vlog2.pop %v1463
        %v1465 = vmul.f32 %v1464, 0.6931472
        %v1466 = vmul.f32 -0.5, %v1309
        %v1467 = vadd.f32 %v1466, 1.0
        %v1468 = vmul.f32 %v1467, %v1309
        %v1469 = vand.u32 2147483647, %v1309
        %vm1470 = vcmp.lt.f32.partialorder %v1469, 0.0004427343
        %v1471 = vsel %vm1470, %v1468, %v1465
        %v1472 = vadd.f32 %v1311, 1.0
        %v1473 = vlog2.pop %v1472
        %v1474 = vmul.f32 %v1473, 0.6931472
        %v1475 = vmul.f32 -0.5, %v1311
        %v1476 = vadd.f32 %v1475, 1.0
        %v1477 = vmul.f32 %v1476, %v1311
        %v1478 = vand.u32 2147483647, %v1311
        %vm1479 = vcmp.lt.f32.partialorder %v1478, 0.0004427343
        %v1480 = vsel %vm1479, %v1477, %v1474
        %v1481 = vadd.f32 %v1313, 1.0
        %v1482 = vlog2.pop %v1481
        %v1483 = vmul.f32 %v1482, 0.6931472
        %v1484 = vmul.f32 -0.5, %v1313
        %v1485 = vadd.f32 %v1484, 1.0
        %v1486 = vmul.f32 %v1485, %v1313
        %v1487 = vand.u32 2147483647, %v1313
        %vm1488 = vcmp.lt.f32.partialorder %v1487, 0.0004427343
        %v1489 = vsel %vm1488, %v1486, %v1483
        %v1490 = vadd.f32 %v1315, 1.0
        %v1491 = vlog2.pop %v1490
        %v1492 = vmul.f32 %v1491, 0.6931472
        %v1493 = vmul.f32 -0.5, %v1315
        %v1494 = vadd.f32 %v1493, 1.0
        %v1495 = vmul.f32 %v1494, %v1315
        %v1496 = vand.u32 2147483647, %v1315
        %vm1497 = vcmp.lt.f32.partialorder %v1496, 0.0004427343
        %v1498 = vsel %vm1497, %v1495, %v1492
        %v1499 = vadd.f32 %v1317, 1.0
        %v1500 = vlog2.pop %v1499
        %v1501 = vmul.f32 %v1500, 0.6931472
        %v1502 = vmul.f32 -0.5, %v1317
        %v1503 = vadd.f32 %v1502, 1.0
        %v1504 = vmul.f32 %v1503, %v1317
        %v1505 = vand.u32 2147483647, %v1317
        %vm1506 = vcmp.lt.f32.partialorder %v1505, 0.0004427343
        %v1507 = vsel %vm1506, %v1504, %v1501
        %v1508 = vadd.f32 %v1319, 1.0
        %v1509 = vlog2.pop %v1508
        %v1510 = vmul.f32 %v1509, 0.6931472
        %v1511 = vmul.f32 -0.5, %v1319
        %v1512 = vadd.f32 %v1511, 1.0
        %v1513 = vmul.f32 %v1512, %v1319
        %v1514 = vand.u32 2147483647, %v1319
        %vm1515 = vcmp.lt.f32.partialorder %v1514, 0.0004427343
        %v1516 = vsel %vm1515, %v1513, %v1510
        %v1517 = vadd.f32 %v1321, 1.0
        %v1518 = vlog2.pop %v1517
        %v1519 = vmul.f32 %v1518, 0.6931472
        %v1520 = vmul.f32 -0.5, %v1321
        %v1521 = vadd.f32 %v1520, 1.0
        %v1522 = vmul.f32 %v1521, %v1321
        %v1523 = vand.u32 2147483647, %v1321
        %vm1524 = vcmp.lt.f32.partialorder %v1523, 0.0004427343
        %v1525 = vsel %vm1524, %v1522, %v1519
        %v1526 = vadd.f32 %v1323, 1.0
        %v1527 = vlog2.pop %v1526
        %v1528 = vmul.f32 %v1527, 0.6931472
        %v1529 = vmul.f32 -0.5, %v1323
        %v1530 = vadd.f32 %v1529, 1.0
        %v1531 = vmul.f32 %v1530, %v1323
        %v1532 = vand.u32 2147483647, %v1323
        %vm1533 = vcmp.lt.f32.partialorder %v1532, 0.0004427343
        %v1534 = vsel %vm1533, %v1531, %v1528
        %v1535 = vadd.f32 %v1325, 1.0
        %v1536 = vlog2.pop %v1535
        %v1537 = vmul.f32 %v1536, 0.6931472
        %v1538 = vmul.f32 -0.5, %v1325
        %v1539 = vadd.f32 %v1538, 1.0
        %v1540 = vmul.f32 %v1539, %v1325
        %v1541 = vand.u32 2147483647, %v1325
        %vm1542 = vcmp.lt.f32.partialorder %v1541, 0.0004427343
        %v1543 = vsel %vm1542, %v1540, %v1537
        %v1544 = vadd.f32 %v1327, 1.0
        %v1545 = vlog2.pop %v1544
        %v1546 = vmul.f32 %v1545, 0.6931472
        %v1547 = vmul.f32 -0.5, %v1327
        %v1548 = vadd.f32 %v1547, 1.0
        %v1549 = vmul.f32 %v1548, %v1327
        %v1550 = vand.u32 2147483647, %v1327
        %vm1551 = vcmp.lt.f32.partialorder %v1550, 0.0004427343
        %v1552 = vsel %vm1551, %v1549, %v1546
        %v1553 = vadd.f32 %v1329, 1.0
        %v1554 = vlog2.pop %v1553
        %v1555 = vmul.f32 %v1554, 0.6931472
        %v1556 = vmul.f32 -0.5, %v1329
        %v1557 = vadd.f32 %v1556, 1.0
        %v1558 = vmul.f32 %v1557, %v1329
        %v1559 = vand.u32 2147483647, %v1329
        %vm1560 = vcmp.lt.f32.partialorder %v1559, 0.0004427343
        %v1561 = vsel %vm1560, %v1558, %v1555
        %v1562 = vadd.f32 %v1331, 1.0
        %v1563 = vlog2.pop %v1562
        %v1564 = vmul.f32 %v1563, 0.6931472
        %v1565 = vmul.f32 -0.5, %v1331
        %v1566 = vadd.f32 %v1565, 1.0
        %v1567 = vmul.f32 %v1566, %v1331
        %v1568 = vand.u32 2147483647, %v1331
        %vm1569 = vcmp.lt.f32.partialorder %v1568, 0.0004427343
        %v1570 = vsel %vm1569, %v1567, %v1564
        %v1571 = vadd.f32 %v1333, 1.0
        %v1572 = vlog2.pop %v1571
        %v1573 = vmul.f32 %v1572, 0.6931472
        %v1574 = vmul.f32 -0.5, %v1333
        %v1575 = vadd.f32 %v1574, 1.0
        %v1576 = vmul.f32 %v1575, %v1333
        %v1577 = vand.u32 2147483647, %v1333
        %vm1578 = vcmp.lt.f32.partialorder %v1577, 0.0004427343
        %v1579 = vsel %vm1578, %v1576, %v1573
        %v1580 = vadd.f32 %v1335, 1.0
        %v1581 = vlog2.pop %v1580
        %v1582 = vmul.f32 %v1581, 0.6931472
        %v1583 = vmul.f32 -0.5, %v1335
        %v1584 = vadd.f32 %v1583, 1.0
        %v1585 = vmul.f32 %v1584, %v1335
        %v1586 = vand.u32 2147483647, %v1335
        %vm1587 = vcmp.lt.f32.partialorder %v1586, 0.0004427343
        %v1588 = vsel %vm1587, %v1585, %v1582
        %v1589 = vadd.f32 %v1337, 1.0
        %v1590 = vlog2.pop %v1589
        %v1591 = vmul.f32 %v1590, 0.6931472
        %v1592 = vmul.f32 -0.5, %v1337
        %v1593 = vadd.f32 %v1592, 1.0
        %v1594 = vmul.f32 %v1593, %v1337
        %v1595 = vand.u32 2147483647, %v1337
        %vm1596 = vcmp.lt.f32.partialorder %v1595, 0.0004427343
        %v1597 = vsel %vm1596, %v1594, %v1591
        %v1598 = vadd.f32 %v1339, 1.0
        %v1599 = vlog2.pop %v1598
        %v1600 = vmul.f32 %v1599, 0.6931472
        %v1601 = vmul.f32 -0.5, %v1339
        %v1602 = vadd.f32 %v1601, 1.0
        %v1603 = vmul.f32 %v1602, %v1339
        %v1604 = vand.u32 2147483647, %v1339
        %vm1605 = vcmp.lt.f32.partialorder %v1604, 0.0004427343
        %v1606 = vsel %vm1605, %v1603, %v1600
        %v1607 = vadd.f32 %v1341, 1.0
        %v1608 = vlog2.pop %v1607
        %v1609 = vmul.f32 %v1608, 0.6931472
        %v1610 = vmul.f32 -0.5, %v1341
        %v1611 = vadd.f32 %v1610, 1.0
        %v1612 = vmul.f32 %v1611, %v1341
        %v1613 = vand.u32 2147483647, %v1341
        %vm1614 = vcmp.lt.f32.partialorder %v1613, 0.0004427343
        %v1615 = vsel %vm1614, %v1612, %v1609
        %v1616 = vadd.f32 %v1343, 1.0
        %v1617 = vlog2.pop %v1616
        %v1618 = vmul.f32 %v1617, 0.6931472
        %v1619 = vmul.f32 -0.5, %v1343
        %v1620 = vadd.f32 %v1619, 1.0
        %v1621 = vmul.f32 %v1620, %v1343
        %v1622 = vand.u32 2147483647, %v1343
        %vm1623 = vcmp.lt.f32.partialorder %v1622, 0.0004427343
        %v1624 = vsel %vm1623, %v1621, %v1618
        %v1625 = vadd.f32 %v1345, 1.0
        %v1626 = vlog2.pop %v1625
        %v1627 = vmul.f32 %v1626, 0.6931472
        %v1628 = vmul.f32 -0.5, %v1345
        %v1629 = vadd.f32 %v1628, 1.0
        %v1630 = vmul.f32 %v1629, %v1345
        %v1631 = vand.u32 2147483647, %v1345
        %vm1632 = vcmp.lt.f32.partialorder %v1631, 0.0004427343
        %v1633 = vsel %vm1632, %v1630, %v1627
        %v1634 = vadd.f32 %v1186, %v1354
        %v1635 = vadd.f32 %v1187, %v1363
        %v1636 = vadd.f32 %v1188, %v1372
        %v1637 = vadd.f32 %v1189, %v1381
        %v1638 = vadd.f32 %v1190, %v1390
        %v1639 = vadd.f32 %v1191, %v1399
        %v1640 = vadd.f32 %v1192, %v1408
        %v1641 = vadd.f32 %v1193, %v1417
        %v1642 = vadd.f32 %v1194, %v1426
        %v1643 = vadd.f32 %v1195, %v1435
        %v1644 = vadd.f32 %v1196, %v1444
        %v1645 = vadd.f32 %v1197, %v1453
        %v1646 = vadd.f32 %v1198, %v1462
        %v1647 = vadd.f32 %v1199, %v1471
        %v1648 = vadd.f32 %v1200, %v1480
        %v1649 = vadd.f32 %v1201, %v1489
        %v1650 = vadd.f32 %v1202, %v1498
        %v1651 = vadd.f32 %v1203, %v1507
        %v1652 = vadd.f32 %v1204, %v1516
        %v1653 = vadd.f32 %v1205, %v1525
        %v1654 = vadd.f32 %v1206, %v1534
        %v1655 = vadd.f32 %v1207, %v1543
        %v1656 = vadd.f32 %v1208, %v1552
        %v1657 = vadd.f32 %v1209, %v1561
        %v1658 = vadd.f32 %v1210, %v1570
        %v1659 = vadd.f32 %v1211, %v1579
        %v1660 = vadd.f32 %v1212, %v1588
        %v1661 = vadd.f32 %v1213, %v1597
        %v1662 = vadd.f32 %v1214, %v1606
        %v1663 = vadd.f32 %v1215, %v1615
        %v1664 = vadd.f32 %v1216, %v1624
        %v1665 = vadd.f32 %v1217, %v1633
        %1666 = vst [vmem:[%s393] sm:$0xff] %v1634
        %1667 = vst [vmem:[%s393 + $0x8] sm:$0xff] %v1635
        %1668 = vst [vmem:[%s393 + $0x10] sm:$0xff] %v1636
        %1669 = vst [vmem:[%s393 + $0x18] sm:$0xff] %v1637
        %1670 = vst [vmem:[%s393 + $0x20] sm:$0xff] %v1638
        %1671 = vst [vmem:[%s393 + $0x28] sm:$0xff] %v1639
        %1672 = vst [vmem:[%s393 + $0x30] sm:$0xff] %v1640
        %1673 = vst [vmem:[%s393 + $0x38] sm:$0xff] %v1641
        %1674 = vst [vmem:[%s393 + $0x40] sm:$0xff] %v1642
        %1675 = vst [vmem:[%s393 + $0x48] sm:$0xff] %v1643
        %1676 = vst [vmem:[%s393 + $0x50] sm:$0xff] %v1644
        %1677 = vst [vmem:[%s393 + $0x58] sm:$0xff] %v1645
        %1678 = vst [vmem:[%s393 + $0x60] sm:$0xff] %v1646
        %1679 = vst [vmem:[%s393 + $0x68] sm:$0xff] %v1647
        %1680 = vst [vmem:[%s393 + $0x70] sm:$0xff] %v1648
        %1681 = vst [vmem:[%s393 + $0x78] sm:$0xff] %v1649
        %1682 = vst [vmem:[%s393 + $0x80] sm:$0xff] %v1650
        %1683 = vst [vmem:[%s393 + $0x88] sm:$0xff] %v1651
        %1684 = vst [vmem:[%s393 + $0x90] sm:$0xff] %v1652
        %1685 = vst [vmem:[%s393 + $0x98] sm:$0xff] %v1653
        %1686 = vst [vmem:[%s393 + $0xa0] sm:$0xff] %v1654
        %1687 = vst [vmem:[%s393 + $0xa8] sm:$0xff] %v1655
        %1688 = vst [vmem:[%s393 + $0xb0] sm:$0xff] %v1656
        %1689 = vst [vmem:[%s393 + $0xb8] sm:$0xff] %v1657
        %1690 = vst [vmem:[%s393 + $0xc0] sm:$0xff] %v1658
        %1691 = vst [vmem:[%s393 + $0xc8] sm:$0xff] %v1659
        %1692 = vst [vmem:[%s393 + $0xd0] sm:$0xff] %v1660
        %1693 = vst [vmem:[%s393 + $0xd8] sm:$0xff] %v1661
        %1694 = vst [vmem:[%s393 + $0xe0] sm:$0xff] %v1662
        %1695 = vst [vmem:[%s393 + $0xe8] sm:$0xff] %v1663
        %1696 = vst [vmem:[%s393 + $0xf0] sm:$0xff] %v1664
        %1697 = vst [vmem:[%s393 + $0xf8] sm:$0xff] %v1665
        %s1698 = sand.u32 %s217, 1
        %s1699 = scalar_lea.sflag [#allocation4], %s1698
        %s1700 = sand.u32 %s217, 1
        %s1701 = smul.addr %s1700, 256
        %s1702 = scalar_lea.vmem [#allocation7], %s1701
        %s1703 = sand.u32 %s243, 1
        %s1704 = scalar_lea.sflag [#allocation9], %s1703
        %s1705 = sand.u32 %s243, 1
        %s1706 = smul.addr %s1705, 256
        %s1707 = scalar_lea.vmem [#allocation8], %s1706
        // Predicated region
        $region61: #{tpu_custom_call.1} parent=51 // pred_check
          %p1708 = pneg %p227
        $region62: #{tpu_custom_call.1} parent=51 // pred_check_branch
          %1710 = sbr.rel (%p1708) target = $region64
        $region63: #{tpu_custom_call.1} parent=51 // pred_region
          %s1711 = smul.u32 16, %s31
          %s1713 = ssub.s32 4096, 4096
          %1714 = vsyncadd %s1699, %s1713
          %s1715 = smul.addr %s1711, 2
          %s1716 = smul.addr %s1715, 128
          %s1717 = scalar_lea.hbm %s8, %s1716
          %s1718 = sshll.u32 %s1702, 4
          %s1719 = int_to_ptr.vmem [resolvable:$true] %s1718
          %1724 = dma.vmem_to_hbm [thread:$0]  %s1719, 4096, %s1717, %s1699, 256, 256, 16
        $region64: #{tpu_custom_call.1} parent=51 // pred_fallthru
          _
        // Predicated region
        $region65: #{tpu_custom_call.1} parent=51 // pred_check
          %p1725 = pneg %p253
        $region66: #{tpu_custom_call.1} parent=51 // pred_check_branch
          %1727 = sbr.rel (%p1725) target = $region68
        $region67: #{tpu_custom_call.1} parent=51 // pred_region
          %s1728 = smul.u32 16, %s31
          %s1730 = ssub.s32 4096, 4096
          %1731 = vsyncadd %s1704, %s1730
          %s1732 = smul.addr %s1728, 2
          %s1733 = smul.addr %s1732, 128
          %s1734 = scalar_lea.hbm %s9, %s1733
          %s1735 = sshll.u32 %s1707, 4
          %s1736 = int_to_ptr.vmem [resolvable:$true] %s1735
          %1741 = dma.vmem_to_hbm [thread:$0]  %s1736, 4096, %s1734, %s1704, 256, 256, 16
        $region68: #{tpu_custom_call.1} parent=51 // pred_fallthru
          _
      $region52: #{tpu_custom_call.1} parent=5 // pred_fallthru
        _
      %p1742 = scmp.le.s32.totalorder 2, %s26
      // Predicated region
      $region69: #{tpu_custom_call.1} parent=5 // pred_check
        %p1743 = pneg %p1742
      $region70: #{tpu_custom_call.1} parent=5 // pred_check_branch
        %1745 = sbr.rel (%p1743) target = $region72
      $region71: #{tpu_custom_call.1} parent=5 // pred_region
        %s1746 = ssub.s32 %s26, 2
        // Predicated region
        $region73: #{tpu_custom_call.1} parent=71 // pred_check
          %p1747 = pneg %p233
        $region74: #{tpu_custom_call.1} parent=71 // pred_check_branch
          %1749 = sbr.rel (%p1747) target = $region76
        $region75: #{tpu_custom_call.1} parent=71 // pred_region
          %s1750 = sand.u32 %s218, 1
          %s1751 = scalar_lea.sflag [#allocation4], %s1750
          %s1752 = sand.u32 %s218, 1
          %s1753 = smul.addr %s1752, 256
          %s1754 = scalar_lea.vmem [#allocation7], %s1753
          %1755 = dma.done %s1751, 4096
        $region76: #{tpu_custom_call.1} parent=71 // pred_fallthru
          _
        // Predicated region
        $region77: #{tpu_custom_call.1} parent=71 // pred_check
          %p1756 = pneg %p259
        $region78: #{tpu_custom_call.1} parent=71 // pred_check_branch
          %1758 = sbr.rel (%p1756) target = $region80
        $region79: #{tpu_custom_call.1} parent=71 // pred_region
          %s1759 = sand.u32 %s244, 1
          %s1760 = scalar_lea.sflag [#allocation9], %s1759
          %s1761 = sand.u32 %s244, 1
          %s1762 = smul.addr %s1761, 256
          %s1763 = scalar_lea.vmem [#allocation8], %s1762
          %1764 = dma.done %s1760, 4096
        $region80: #{tpu_custom_call.1} parent=71 // pred_fallthru
          _
      $region72: #{tpu_custom_call.1} parent=5 // pred_fallthru
        _
    $region6: #{tpu_custom_call.1} parent=1 // loop_footer
      %s30 = sadd.s32 1, %s26
    $region7: #{tpu_custom_call.1} parent=1 // loop_footer_branch
      %25 = sbr.rel target = $region3
    $region8: #{tpu_custom_call.1} parent=1 // loop_exit
      _
    %1765 = vsyncpa [#allocation3], 1
    %s1766 = scalar_lea.sflag [#allocation3], 1
    %1767 = vsyncpa %s1766, 1
    %1768 = vsyncpa [#allocation6], 1
    %s1769 = scalar_lea.sflag [#allocation6], 1
    %1770 = vsyncpa %s1769, 1
    %1771 = vsyncpa [#allocation4], 1
    %s1772 = scalar_lea.sflag [#allocation4], 1
    %1773 = vsyncpa %s1772, 1
    %1774 = vsyncpa [#allocation9], 1
    %s1775 = scalar_lea.sflag [#allocation9], 1
    %1776 = vsyncpa %s1775, 1

</llo_original>
